<compile_context>
chip_gen: v7x
topology: tpu7x:2x2x1
jax: 0.10.0
libtpu: 0.0.40
codegen_flags: <defaults>
</compile_context>

<pallas_src>
import functools
import math

import jax
import jax.numpy as jnp
from jax.experimental import pallas as pl
from jax.experimental.pallas import tpu as pltpu

_NEG_PAD = -1e30   # padded key columns -> exp underflows to exactly 0
_NEG_MASK = -1e9   # matches PyTorch masked_fill(attn_mask == 0, -1e9)


def _round_up(x, m):
    return ((x + m - 1) // m) * m


def _divisor_tile(dim_p, cap):
    """Largest multiple of 128 <= cap that divides dim_p (dim_p % 128 == 0)."""
    t = min(cap, dim_p)
    while dim_p % t != 0:
        t -= 128
    return t


# ----------------------------- Pallas kernels ------------------------------

def _linear_kernel(x_ref, w_ref, b_ref, o_ref, acc_ref):
    """Tiled matmul + bias.  grid = (M/tm, N/tn, K/tk), K innermost."""
    @pl.when(pl.program_id(2) == 0)
    def _():
        acc_ref[...] = jnp.zeros_like(acc_ref)

    acc_ref[...] += jnp.dot(x_ref[...], w_ref[...],
                            preferred_element_type=jnp.float32)

    @pl.when(pl.program_id(2) == pl.num_programs(2) - 1)
    def _():
        # bias added once, in the epilogue (not per K step)
        o_ref[...] = (acc_ref[...] + b_ref[...]).astype(o_ref.dtype)


def _attention_kernel(*refs, num_heads, head_dim, sk_valid, sk_pad, has_mask):
    """One (batch, q-tile): per-head scores -> softmax -> weights & context.

    q/k/v come in (S, E) layout; heads are static lane slices of width
    head_dim (no head_dim padding, no XLA transposes). The 1/sqrt(Dh) scale
    is already folded into the q projection.
    """
    if has_mask:
        q_ref, k_ref, v_ref, m_ref, attn_ref, ctx_ref = refs
    else:
        q_ref, k_ref, v_ref, attn_ref, ctx_ref = refs
        m_ref = None

    q = q_ref[0]            # (tq,   E) bf16 (pre-scaled)
    k = k_ref[0]            # (Sk_p, E) bf16
    v = v_ref[0]            # (Sk_p, E) bf16
    tq = q.shape[0]

    keep = m_ref[0] != 0 if has_mask else None          # (tq, Sk_p) bool
    pad_cols = None
    if sk_pad > sk_valid:                                # in-kernel pad mask,
        col = jax.lax.broadcasted_iota(jnp.int32, (tq, sk_pad), 1)
        pad_cols = col >= sk_valid                       # no HBM bias tensor

    ctx_parts = []
    for h in range(num_heads):                           # static unrolled loop
        lo = h * head_dim
        qh = q[:, lo:lo + head_dim]
        kh = k[:, lo:lo + head_dim]
        vh = v[:, lo:lo + head_dim]

        s = jax.lax.dot_general(qh, kh, (((1,), (1,)), ((), ())),
                                preferred_element_type=jnp.float32)
        if keep is not None:
            s = jnp.where(keep, s, _NEG_MASK)            # masked_fill semantics
        if pad_cols is not None:
            s = jnp.where(pad_cols, _NEG_PAD, s)

        row_max = jnp.max(s, axis=-1, keepdims=True)
        e = jnp.exp(s - row_max)
        denom = jnp.sum(e, axis=-1, keepdims=True)
        p = e * pl.reciprocal(denom, approx=True)        # EUP, not VALU divide

        attn_ref[0, h] = p.astype(attn_ref.dtype)
        ctx_parts.append(jnp.dot(p.astype(vh.dtype), vh,
                                 preferred_element_type=jnp.float32))

    ctx_ref[0] = jnp.concatenate(ctx_parts, axis=-1).astype(ctx_ref.dtype)


# --------------------------- Pallas call wrappers ---------------------------

def linear(x, wp, bp, n_out, *, out_dtype=jnp.float32, tm=512, tn=512, tk=512):
    """y = x @ w + b with pre-padded bf16 weight wp (Kp,Np), f32 bias bp (1,Np)."""
    M, K = x.shape
    Kp, Np = wp.shape

    tm = min(tm, _round_up(M, 8))
    tn = _divisor_tile(Np, tn)
    tk = _divisor_tile(Kp, tk)
    Mp = _round_up(M, tm)

    xp = x
    if (Mp, Kp) != (M, K):
        xp = jnp.pad(x, ((0, Mp - M), (0, Kp - K)))
    xp = xp.astype(jnp.bfloat16)

    out = pl.pallas_call(
        _linear_kernel,
        out_shape=jax.ShapeDtypeStruct((Mp, Np), out_dtype),
        grid_spec=pltpu.PrefetchScalarGridSpec(
            num_scalar_prefetch=0,
            grid=(Mp // tm, Np // tn, Kp // tk),
            in_specs=[pl.BlockSpec((tm, tk), lambda i, j, k: (i, k)),
                      pl.BlockSpec((tk, tn), lambda i, j, k: (k, j)),
                      pl.BlockSpec((1, tn), lambda i, j, k: (0, j))],
            out_specs=pl.BlockSpec((tm, tn), lambda i, j, k: (i, j)),
            scratch_shapes=[pltpu.VMEM((tm, tn), jnp.float32)]),
        compiler_params=pltpu.CompilerParams(
            dimension_semantics=("parallel", "parallel", "arbitrary")),
    )(xp, wp, bp)
    return out[:M, :n_out]


def _attn_tile_q(Sq, Sk_p, E, H, attn_itemsize):
    """Pick q-tile from a per-generation VMEM budget (v7x has half of v6e)."""
    try:
        vmem = pltpu.get_tpu_info().vmem_capacity_bytes
    except Exception:
        vmem = 64 * 1024 * 1024
    budget = vmem // 2          # headroom for compiler scratch / spills

    def footprint(t):
        blocks = (t * E * 2                       # q (bf16)
                  + 2 * Sk_p * E * 2              # k, v (bf16, full Sk resident)
                  + t * Sk_p * 2                  # optional mask (bf16)
                  + H * t * Sk_p * attn_itemsize  # attn-weight output block
                  + t * E * 2)                    # ctx output (bf16)
        interm = 3 * t * Sk_p * 4 + t * E * 4     # s/e/p + ctx f32 intermediates
        return 2 * blocks + interm                # double-buffered pipeline

    full = _round_up(Sq, 8)
    cands = ([full] if full <= 512 else []) + [t for t in (512, 256, 128, 64, 32)
                                               if t < full]
    for t in cands:
        if footprint(t) <= budget:
            return t, budget
    return cands[-1], budget


def attention(q, k, v, attn_mask, *, num_heads, attn_dtype=jnp.float32):
    """q: (B,Sq,E), k/v: (B,Sk,E) bf16, attn_mask broadcastable to (B,Sq,Sk).

    Returns (attn_weights (B,H,Sq,Sk) attn_dtype, context (B,Sq,E) bf16)."""
    B, Sq, E = q.shape
    Sk = k.shape[1]
    H = num_heads
    Dh = E // H

    # Pad the key axis to 128 only when it is large & unaligned (lane density
    # of the attn writeback); small Sk keeps its natural width.
    if Sk % 128 == 0:
        Sk_p = Sk
    elif Sk > 128:
        Sk_p = _round_up(Sk, 128)
    else:
        Sk_p = _round_up(Sk, 8)

    tq, vmem_budget = _attn_tile_q(Sq, Sk_p, E, H, jnp.dtype(attn_dtype).itemsize)
    Sq_p = _round_up(Sq, tq)

    if Sq_p != Sq:
        q = jnp.pad(q, ((0, 0), (0, Sq_p - Sq), (0, 0)))
    if Sk_p != Sk:
        k = jnp.pad(k, ((0, 0), (0, Sk_p - Sk), (0, 0)))
        v = jnp.pad(v, ((0, 0), (0, Sk_p - Sk), (0, 0)))

    has_mask = attn_mask is not None
    inputs = [q, k, v]
    in_specs = [
        pl.BlockSpec((1, tq, E), lambda b, i: (b, i, 0)),
        pl.BlockSpec((1, Sk_p, E), lambda b, i: (b, 0, 0)),   # constant across
        pl.BlockSpec((1, Sk_p, E), lambda b, i: (b, 0, 0)),   # inner q-tiles
    ]
    if has_mask:
        m = jnp.broadcast_to(attn_mask, (B, Sq, Sk))
        m = (m != 0).astype(jnp.bfloat16)                      # 0/1, 2 B/elem
        m = jnp.pad(m, ((0, 0), (0, Sq_p - Sq), (0, Sk_p - Sk)))
        inputs.append(m)
        in_specs.append(pl.BlockSpec((1, tq, Sk_p), lambda b, i: (b, i, 0)))

    kernel = functools.partial(_attention_kernel, num_heads=H, head_dim=Dh,
                               sk_valid=Sk, sk_pad=Sk_p, has_mask=has_mask)

    attn_p, ctx_p = pl.pallas_call(
        kernel,
        out_shape=(jax.ShapeDtypeStruct((B, H, Sq_p, Sk_p), attn_dtype),
                   jax.ShapeDtypeStruct((B, Sq_p, E), jnp.bfloat16)),
        grid_spec=pltpu.PrefetchScalarGridSpec(
            num_scalar_prefetch=0,
            grid=(B, Sq_p // tq),
            in_specs=in_specs,
            out_specs=[
                pl.BlockSpec((1, H, tq, Sk_p), lambda b, i: (b, 0, i, 0)),
                pl.BlockSpec((1, tq, E), lambda b, i: (b, i, 0)),
            ]),
        compiler_params=pltpu.CompilerParams(
            dimension_semantics=("parallel", "parallel"),
            vmem_limit_bytes=int(vmem_budget)),
    )(*inputs)

    return attn_p[:, :, :Sq, :Sk], ctx_p[:, :Sq, :]


# ----------------------------- parameters / glue -----------------------------

def init_params(key, embed_dim):
    """nn.Linear-style init; weights stored (in, out) = W^T for x @ W + b."""
    ks = jax.random.split(key, 8)
    bound = 1.0 / math.sqrt(embed_dim)

    def lin(kw, kb):
        w = jax.random.uniform(kw, (embed_dim, embed_dim), jnp.float32,
                               -bound, bound)
        b = jax.random.uniform(kb, (embed_dim,), jnp.float32, -bound, bound)
        return w, b

    return {"q": lin(ks[0], ks[1]), "k": lin(ks[2], ks[3]),
            "v": lin(ks[4], ks[5]), "out": lin(ks[6], ks[7])}


def prepare_params(params, num_heads):
    """One-time (outside jit): fold 1/sqrt(Dh) into the q projection, pad
    weights to lane-dense multiples of 128 and cast to bf16, keep bias f32."""
    E = params["q"][0].shape[0]
    scale = 1.0 / math.sqrt(E // num_heads)
    prepared = {}
    for name, (w, b) in params.items():
        if name == "q":
            w = w * scale
            b = b * scale
        K, N = w.shape
        Kp, Np = _round_up(K, 128), _round_up(N, 128)
        prepared[name] = {
            "w": jnp.pad(w, ((0, Kp - K), (0, Np - N))).astype(jnp.bfloat16),
            "b": jnp.pad(b, (0, Np - N)).astype(jnp.float32).reshape(1, Np),
        }
    return prepared


@functools.partial(jax.jit, static_argnames=("num_heads",))
def mhca_forward(pparams, query, key, value, attn_mask=None, *, num_heads=4):
    B, Sq, E = query.shape
    Sk = key.shape[1]

    # Projections stay in (B, S, E) layout -> no head split/merge transposes.
    # q/k/v use different source tensors so they cannot fuse into one matmul.
    q = linear(query.reshape(B * Sq, E), pparams["q"]["w"], pparams["q"]["b"],
               E, out_dtype=jnp.bfloat16).reshape(B, Sq, E)
    k = linear(key.reshape(B * Sk, E), pparams["k"]["w"], pparams["k"]["b"],
               E, out_dtype=jnp.bfloat16).reshape(B, Sk, E)
    v = linear(value.reshape(B * Sk, E), pparams["v"]["w"], pparams["v"]["b"],
               E, out_dtype=jnp.bfloat16).reshape(B, Sk, E)

    attn_weights, context = attention(q, k, v, attn_mask, num_heads=num_heads)

    output = linear(context.reshape(B * Sq, E), pparams["out"]["w"],
                    pparams["out"]["b"], E, out_dtype=jnp.float32)
    return output.reshape(B, Sq, E), attn_weights


# ------------------------------ pure-JAX reference ---------------------------

def mhca_reference(params, query, key, value, attn_mask, num_heads):
    B, Sq, E = query.shape
    Sk = key.shape[1]
    H, Dh = num_heads, E // num_heads
    lin = lambda x, wb: x @ wb[0] + wb[1]
    q = lin(query, params["q"]).reshape(B, Sq, H, Dh).transpose(0, 2, 1, 3)
    k = lin(key, params["k"]).reshape(B, Sk, H, Dh).transpose(0, 2, 1, 3)
    v = lin(value, params["v"]).reshape(B, Sk, H, Dh).transpose(0, 2, 1, 3)
    s = jnp.einsum("bhqd,bhkd->bhqk", q, k) / math.sqrt(Dh)
    if attn_mask is not None:
        m = jnp.broadcast_to(attn_mask, (B, Sq, Sk))[:, None]
        s = jnp.where(m == 0, _NEG_MASK, s)
    p = jax.nn.softmax(s, axis=-1)
    ctx = jnp.einsum("bhqk,bhkd->bhqd", p, v).transpose(0, 2, 1, 3)
    out = lin(ctx.reshape(B, Sq, E), params["out"])
    return out, p


# ----------------------------------- main ------------------------------------

if __name__ == "__main__":
    key0 = jax.random.PRNGKey(0)
    embed_dim, num_heads = 32, 4
    B, Sq, Sk = 2, 8, 8

    params = init_params(jax.random.fold_in(key0, 0), embed_dim)
    pparams = prepare_params(params, num_heads)   # one-time pad/cast/scale fold

    kq, kk, kv, km = jax.random.split(jax.random.fold_in(key0, 1), 4)
    query = jax.random.normal(kq, (B, Sq, embed_dim), jnp.float32)
    key_t = jax.random.normal(kk, (B, Sk, embed_dim), jnp.float32)
    value = jax.random.normal(kv, (B, Sk, embed_dim), jnp.float32)
    attn_mask = (jax.random.uniform(km, (B, Sq, Sk)) > 0.3).astype(jnp.int32)
    attn_mask = attn_mask.at[..., 0].set(1)       # >=1 valid key per row

    for mask in (None, attn_mask):
        output, attn = mhca_forward(pparams, query, key_t, value, mask,
                                    num_heads=num_heads)
        output, attn = jax.block_until_ready((output, attn))

        assert output.shape == (B, Sq, embed_dim), output.shape
        assert attn.shape == (B, num_heads, Sq, Sk), attn.shape
        assert jnp.all(jnp.isfinite(output)) and jnp.all(jnp.isfinite(attn))
        # softmax rows sum to 1 (approx reciprocal -> slightly looser tol)
        assert jnp.allclose(jnp.sum(attn, axis=-1), 1.0, atol=5e-3)

        # numerics vs pure-JAX f32 reference (bf16 MXU -> loose tolerance)
        ref_out, ref_attn = mhca_reference(params, query, key_t, value, mask,
                                           num_heads)
        assert jnp.allclose(output, ref_out, atol=5e-2), float(
            jnp.max(jnp.abs(output - ref_out)))
        assert jnp.allclose(attn, ref_attn, atol=2e-2), float(
            jnp.max(jnp.abs(attn - ref_attn)))

    print("KERNEL_OK")
</pallas_src>

<mosaic_0001>
module attributes {stable_mosaic.version = 11 : i64} {
  func.func @_linear_kernel(%arg0: i32, %arg1: i32, %arg2: i32, %arg3: memref<16x128xbf16, #tpu.memory_space<vmem>>, %arg4: memref<128x128xbf16, #tpu.memory_space<vmem>>, %arg5: memref<1x128xf32, #tpu.memory_space<vmem>>, %arg6: memref<16x128xbf16, #tpu.memory_space<vmem>>, %arg7: memref<16x128xf32, #tpu.memory_space<vmem>>) attributes {dimension_semantics = [#tpu.dimension_semantics<parallel>, #tpu.dimension_semantics<parallel>, #tpu.dimension_semantics<arbitrary>], iteration_bounds = array<i64: 1, 1, 1>, scalar_prefetch = 0 : i64, scratch_operands = 1 : i64, tpu.core_type = #tpu.core_type<tc>, window_params = [{transform_indices = @transform_0, window_bounds = array<i64: 16, 128>}, {transform_indices = @transform_1, window_bounds = array<i64: 128, 128>}, {transform_indices = @transform_2, window_bounds = array<i64: 1, 128>}, {transform_indices = @transform_3, window_bounds = array<i64: 16, 128>}]} {
    %c0_i32 = arith.constant 0 : i32
    %0 = arith.cmpi eq, %arg2, %c0_i32 : i32
    %1 = arith.extui %0 : i1 to i32
    %c0_i32_0 = arith.constant 0 : i32
    %2 = arith.cmpi ne, %1, %c0_i32_0 : i32
    scf.if %2 {
      %cst_10 = arith.constant 0.000000e+00 : f32
      %12 = vector.broadcast %cst_10 : f32 to vector<16x128xf32>
      %c0_11 = arith.constant 0 : index
      %c0_12 = arith.constant 0 : index
      %13 = vector.load %arg7[%c0_11, %c0_12] : memref<16x128xf32, #tpu.memory_space<vmem>>, vector<16x128xf32>
      tpu.vector_store %arg7[%c0_11, %c0_12], %12 {strides = array<i32>} : memref<16x128xf32, #tpu.memory_space<vmem>>, vector<16x128xf32>,
    } else {
    }
    %c0 = arith.constant 0 : index
    %c0_1 = arith.constant 0 : index
    %3 = vector.load %arg7[%c0, %c0_1] : memref<16x128xf32, #tpu.memory_space<vmem>>, vector<16x128xf32>
    %c0_2 = arith.constant 0 : index
    %c0_3 = arith.constant 0 : index
    %4 = vector.load %arg3[%c0_2, %c0_3] : memref<16x128xbf16, #tpu.memory_space<vmem>>, vector<16x128xbf16>
    %c0_4 = arith.constant 0 : index
    %c0_5 = arith.constant 0 : index
    %5 = vector.load %arg4[%c0_4, %c0_5] : memref<128x128xbf16, #tpu.memory_space<vmem>>, vector<128x128xbf16>
    %cst = arith.constant dense<0.000000e+00> : vector<16x128xf32>
    %6 = tpu.matmul %4, %5, %cst {dimension_numbers = #tpu.dot_dimension_numbers<[1], [0], [0], [1], [0, 0, 1, 1], [], []>} : vector<16x128xbf16>, vector<128x128xbf16>, vector<16x128xf32> -> vector<16x128xf32>
    %7 = arith.addf %3, %6 : vector<16x128xf32>
    %c0_6 = arith.constant 0 : index
    %c0_7 = arith.constant 0 : index
    %8 = vector.load %arg7[%c0_6, %c0_7] : memref<16x128xf32, #tpu.memory_space<vmem>>, vector<16x128xf32>
    tpu.vector_store %arg7[%c0_6, %c0_7], %7 {strides = array<i32>} : memref<16x128xf32, #tpu.memory_space<vmem>>, vector<16x128xf32>,
    %c0_i32_8 = arith.constant 0 : i32
    %9 = arith.cmpi eq, %arg2, %c0_i32_8 : i32
    %10 = arith.extui %9 : i1 to i32
    %c0_i32_9 = arith.constant 0 : i32
    %11 = arith.cmpi ne, %10, %c0_i32_9 : i32
    scf.if %11 {
      %c0_10 = arith.constant 0 : index
      %c0_11 = arith.constant 0 : index
      %12 = vector.load %arg7[%c0_10, %c0_11] : memref<16x128xf32, #tpu.memory_space<vmem>>, vector<16x128xf32>
      %c0_12 = arith.constant 0 : index
      %c0_13 = arith.constant 0 : index
      %13 = vector.load %arg5[%c0_12, %c0_13] : memref<1x128xf32, #tpu.memory_space<vmem>>, vector<1x128xf32>
      %14 = vector.broadcast %13 : vector<1x128xf32> to vector<16x128xf32>
      %15 = arith.addf %12, %14 : vector<16x128xf32>
      %16 = arith.truncf %15 : vector<16x128xf32> to vector<16x128xbf16>
      %c0_14 = arith.constant 0 : index
      %c0_15 = arith.constant 0 : index
      %17 = vector.load %arg6[%c0_14, %c0_15] : memref<16x128xbf16, #tpu.memory_space<vmem>>, vector<16x128xbf16>
      tpu.vector_store %arg6[%c0_14, %c0_15], %16 {strides = array<i32>} : memref<16x128xbf16, #tpu.memory_space<vmem>>, vector<16x128xbf16>,
    } else {
    }
    return
  }
  func.func @transform_0(%arg0: i32, %arg1: i32, %arg2: i32) -> (i32, i32) {
    %c0_i32 = arith.constant 0 : i32
    return %arg0, %arg2 : i32, i32
  }
  func.func @transform_1(%arg0: i32, %arg1: i32, %arg2: i32) -> (i32, i32) {
    %c0_i32 = arith.constant 0 : i32
    return %arg2, %arg1 : i32, i32
  }
  func.func @transform_2(%arg0: i32, %arg1: i32, %arg2: i32) -> (i32, i32) {
    %c0_i32 = arith.constant 0 : i32
    %c0_i32_0 = arith.constant 0 : i32
    return %c0_i32, %arg1 : i32, i32
  }
  func.func @transform_3(%arg0: i32, %arg1: i32, %arg2: i32) -> (i32, i32) {
    %c0_i32 = arith.constant 0 : i32
    return %arg0, %arg1 : i32, i32
  }
}

module attributes {stable_mosaic.version = 11 : i64} {
  func.func @_linear_kernel(%arg0: i32, %arg1: i32, %arg2: i32, %arg3: memref<16x128xbf16, #tpu.memory_space<vmem>>, %arg4: memref<128x128xbf16, #tpu.memory_space<vmem>>, %arg5: memref<1x128xf32, #tpu.memory_space<vmem>>, %arg6: memref<16x128xbf16, #tpu.memory_space<vmem>>, %arg7: memref<16x128xf32, #tpu.memory_space<vmem>>) attributes {dimension_semantics = [#tpu.dimension_semantics<parallel>, #tpu.dimension_semantics<parallel>, #tpu.dimension_semantics<arbitrary>], iteration_bounds = array<i64: 1, 1, 1>, scalar_prefetch = 0 : i64, scratch_operands = 1 : i64, tpu.core_type = #tpu.core_type<tc>, window_params = [{transform_indices = @transform_0, window_bounds = array<i64: 16, 128>}, {transform_indices = @transform_1, window_bounds = array<i64: 128, 128>}, {transform_indices = @transform_2, window_bounds = array<i64: 1, 128>}, {transform_indices = @transform_3, window_bounds = array<i64: 16, 128>}]} {
    %c0_i32 = arith.constant 0 : i32
    %0 = arith.cmpi eq, %arg2, %c0_i32 : i32
    %1 = arith.extui %0 : i1 to i32
    %c0_i32_0 = arith.constant 0 : i32
    %2 = arith.cmpi ne, %1, %c0_i32_0 : i32
    scf.if %2 {
      %cst_10 = arith.constant 0.000000e+00 : f32
      %12 = vector.broadcast %cst_10 : f32 to vector<16x128xf32>
      %c0_11 = arith.constant 0 : index
      %c0_12 = arith.constant 0 : index
      %13 = vector.load %arg7[%c0_11, %c0_12] : memref<16x128xf32, #tpu.memory_space<vmem>>, vector<16x128xf32>
      tpu.vector_store %arg7[%c0_11, %c0_12], %12 {strides = array<i32>} : memref<16x128xf32, #tpu.memory_space<vmem>>, vector<16x128xf32>,
    } else {
    }
    %c0 = arith.constant 0 : index
    %c0_1 = arith.constant 0 : index
    %3 = vector.load %arg7[%c0, %c0_1] : memref<16x128xf32, #tpu.memory_space<vmem>>, vector<16x128xf32>
    %c0_2 = arith.constant 0 : index
    %c0_3 = arith.constant 0 : index
    %4 = vector.load %arg3[%c0_2, %c0_3] : memref<16x128xbf16, #tpu.memory_space<vmem>>, vector<16x128xbf16>
    %c0_4 = arith.constant 0 : index
    %c0_5 = arith.constant 0 : index
    %5 = vector.load %arg4[%c0_4, %c0_5] : memref<128x128xbf16, #tpu.memory_space<vmem>>, vector<128x128xbf16>
    %cst = arith.constant dense<0.000000e+00> : vector<16x128xf32>
    %6 = tpu.matmul %4, %5, %cst {dimension_numbers = #tpu.dot_dimension_numbers<[1], [0], [0], [1], [0, 0, 1, 1], [], []>} : vector<16x128xbf16>, vector<128x128xbf16>, vector<16x128xf32> -> vector<16x128xf32>
    %7 = arith.addf %3, %6 : vector<16x128xf32>
    %c0_6 = arith.constant 0 : index
    %c0_7 = arith.constant 0 : index
    %8 = vector.load %arg7[%c0_6, %c0_7] : memref<16x128xf32, #tpu.memory_space<vmem>>, vector<16x128xf32>
    tpu.vector_store %arg7[%c0_6, %c0_7], %7 {strides = array<i32>} : memref<16x128xf32, #tpu.memory_space<vmem>>, vector<16x128xf32>,
    %c0_i32_8 = arith.constant 0 : i32
    %9 = arith.cmpi eq, %arg2, %c0_i32_8 : i32
    %10 = arith.extui %9 : i1 to i32
    %c0_i32_9 = arith.constant 0 : i32
    %11 = arith.cmpi ne, %10, %c0_i32_9 : i32
    scf.if %11 {
      %c0_10 = arith.constant 0 : index
      %c0_11 = arith.constant 0 : index
      %12 = vector.load %arg7[%c0_10, %c0_11] : memref<16x128xf32, #tpu.memory_space<vmem>>, vector<16x128xf32>
      %c0_12 = arith.constant 0 : index
      %c0_13 = arith.constant 0 : index
      %13 = vector.load %arg5[%c0_12, %c0_13] : memref<1x128xf32, #tpu.memory_space<vmem>>, vector<1x128xf32>
      %14 = vector.broadcast %13 : vector<1x128xf32> to vector<16x128xf32>
      %15 = arith.addf %12, %14 : vector<16x128xf32>
      %16 = arith.truncf %15 : vector<16x128xf32> to vector<16x128xbf16>
      %c0_14 = arith.constant 0 : index
      %c0_15 = arith.constant 0 : index
      %17 = vector.load %arg6[%c0_14, %c0_15] : memref<16x128xbf16, #tpu.memory_space<vmem>>, vector<16x128xbf16>
      tpu.vector_store %arg6[%c0_14, %c0_15], %16 {strides = array<i32>} : memref<16x128xbf16, #tpu.memory_space<vmem>>, vector<16x128xbf16>,
    } else {
    }
    return
  }
  func.func @transform_0(%arg0: i32, %arg1: i32, %arg2: i32) -> (i32, i32) {
    %c0_i32 = arith.constant 0 : i32
    return %arg0, %arg2 : i32, i32
  }
  func.func @transform_1(%arg0: i32, %arg1: i32, %arg2: i32) -> (i32, i32) {
    %c0_i32 = arith.constant 0 : i32
    return %arg2, %arg1 : i32, i32
  }
  func.func @transform_2(%arg0: i32, %arg1: i32, %arg2: i32) -> (i32, i32) {
    %c0_i32 = arith.constant 0 : i32
    %c0_i32_0 = arith.constant 0 : i32
    return %c0_i32, %arg1 : i32, i32
  }
  func.func @transform_3(%arg0: i32, %arg1: i32, %arg2: i32) -> (i32, i32) {
    %c0_i32 = arith.constant 0 : i32
    return %arg0, %arg1 : i32, i32
  }
}

module attributes {stable_mosaic.version = 11 : i64} {
  func.func @_linear_kernel(%arg0: i32, %arg1: i32, %arg2: i32, %arg3: memref<16x128xbf16, #tpu.memory_space<vmem>>, %arg4: memref<128x128xbf16, #tpu.memory_space<vmem>>, %arg5: memref<1x128xf32, #tpu.memory_space<vmem>>, %arg6: memref<16x128xf32, #tpu.memory_space<vmem>>, %arg7: memref<16x128xf32, #tpu.memory_space<vmem>>) attributes {dimension_semantics = [#tpu.dimension_semantics<parallel>, #tpu.dimension_semantics<parallel>, #tpu.dimension_semantics<arbitrary>], iteration_bounds = array<i64: 1, 1, 1>, scalar_prefetch = 0 : i64, scratch_operands = 1 : i64, tpu.core_type = #tpu.core_type<tc>, window_params = [{transform_indices = @transform_0, window_bounds = array<i64: 16, 128>}, {transform_indices = @transform_1, window_bounds = array<i64: 128, 128>}, {transform_indices = @transform_2, window_bounds = array<i64: 1, 128>}, {transform_indices = @transform_3, window_bounds = array<i64: 16, 128>}]} {
    %c0_i32 = arith.constant 0 : i32
    %0 = arith.cmpi eq, %arg2, %c0_i32 : i32
    %1 = arith.extui %0 : i1 to i32
    %c0_i32_0 = arith.constant 0 : i32
    %2 = arith.cmpi ne, %1, %c0_i32_0 : i32
    scf.if %2 {
      %cst_10 = arith.constant 0.000000e+00 : f32
      %12 = vector.broadcast %cst_10 : f32 to vector<16x128xf32>
      %c0_11 = arith.constant 0 : index
      %c0_12 = arith.constant 0 : index
      %13 = vector.load %arg7[%c0_11, %c0_12] : memref<16x128xf32, #tpu.memory_space<vmem>>, vector<16x128xf32>
      tpu.vector_store %arg7[%c0_11, %c0_12], %12 {strides = array<i32>} : memref<16x128xf32, #tpu.memory_space<vmem>>, vector<16x128xf32>,
    } else {
    }
    %c0 = arith.constant 0 : index
    %c0_1 = arith.constant 0 : index
    %3 = vector.load %arg7[%c0, %c0_1] : memref<16x128xf32, #tpu.memory_space<vmem>>, vector<16x128xf32>
    %c0_2 = arith.constant 0 : index
    %c0_3 = arith.constant 0 : index
    %4 = vector.load %arg3[%c0_2, %c0_3] : memref<16x128xbf16, #tpu.memory_space<vmem>>, vector<16x128xbf16>
    %c0_4 = arith.constant 0 : index
    %c0_5 = arith.constant 0 : index
    %5 = vector.load %arg4[%c0_4, %c0_5] : memref<128x128xbf16, #tpu.memory_space<vmem>>, vector<128x128xbf16>
    %cst = arith.constant dense<0.000000e+00> : vector<16x128xf32>
    %6 = tpu.matmul %4, %5, %cst {dimension_numbers = #tpu.dot_dimension_numbers<[1], [0], [0], [1], [0, 0, 1, 1], [], []>} : vector<16x128xbf16>, vector<128x128xbf16>, vector<16x128xf32> -> vector<16x128xf32>
    %7 = arith.addf %3, %6 : vector<16x128xf32>
    %c0_6 = arith.constant 0 : index
    %c0_7 = arith.constant 0 : index
    %8 = vector.load %arg7[%c0_6, %c0_7] : memref<16x128xf32, #tpu.memory_space<vmem>>, vector<16x128xf32>
    tpu.vector_store %arg7[%c0_6, %c0_7], %7 {strides = array<i32>} : memref<16x128xf32, #tpu.memory_space<vmem>>, vector<16x128xf32>,
    %c0_i32_8 = arith.constant 0 : i32
    %9 = arith.cmpi eq, %arg2, %c0_i32_8 : i32
    %10 = arith.extui %9 : i1 to i32
    %c0_i32_9 = arith.constant 0 : i32
    %11 = arith.cmpi ne, %10, %c0_i32_9 : i32
    scf.if %11 {
      %c0_10 = arith.constant 0 : index
      %c0_11 = arith.constant 0 : index
      %12 = vector.load %arg7[%c0_10, %c0_11] : memref<16x128xf32, #tpu.memory_space<vmem>>, vector<16x128xf32>
      %c0_12 = arith.constant 0 : index
      %c0_13 = arith.constant 0 : index
      %13 = vector.load %arg5[%c0_12, %c0_13] : memref<1x128xf32, #tpu.memory_space<vmem>>, vector<1x128xf32>
      %14 = vector.broadcast %13 : vector<1x128xf32> to vector<16x128xf32>
      %15 = arith.addf %12, %14 : vector<16x128xf32>
      %c0_14 = arith.constant 0 : index
      %c0_15 = arith.constant 0 : index
      %16 = vector.load %arg6[%c0_14, %c0_15] : memref<16x128xf32, #tpu.memory_space<vmem>>, vector<16x128xf32>
      tpu.vector_store %arg6[%c0_14, %c0_15], %15 {strides = array<i32>} : memref<16x128xf32, #tpu.memory_space<vmem>>, vector<16x128xf32>,
    } else {
    }
    return
  }
  func.func @transform_0(%arg0: i32, %arg1: i32, %arg2: i32) -> (i32, i32) {
    %c0_i32 = arith.constant 0 : i32
    return %arg0, %arg2 : i32, i32
  }
  func.func @transform_1(%arg0: i32, %arg1: i32, %arg2: i32) -> (i32, i32) {
    %c0_i32 = arith.constant 0 : i32
    return %arg2, %arg1 : i32, i32
  }
  func.func @transform_2(%arg0: i32, %arg1: i32, %arg2: i32) -> (i32, i32) {
    %c0_i32 = arith.constant 0 : i32
    %c0_i32_0 = arith.constant 0 : i32
    return %c0_i32, %arg1 : i32, i32
  }
  func.func @transform_3(%arg0: i32, %arg1: i32, %arg2: i32) -> (i32, i32) {
    %c0_i32 = arith.constant 0 : i32
    return %arg0, %arg1 : i32, i32
  }
}

module attributes {stable_mosaic.version = 11 : i64} {
  func.func @_attention_kernel(%arg0: i32, %arg1: i32, %arg2: memref<1x8x32xbf16, #tpu.memory_space<vmem>>, %arg3: memref<1x8x32xbf16, #tpu.memory_space<vmem>>, %arg4: memref<1x8x32xbf16, #tpu.memory_space<vmem>>, %arg5: memref<1x4x8x8xf32, #tpu.memory_space<vmem>>, %arg6: memref<1x8x32xbf16, #tpu.memory_space<vmem>>) attributes {dimension_semantics = [#tpu.dimension_semantics<parallel>, #tpu.dimension_semantics<parallel>], iteration_bounds = array<i64: 2, 1>, scalar_prefetch = 0 : i64, scratch_operands = 0 : i64, tpu.core_type = #tpu.core_type<tc>, window_params = [{transform_indices = @transform_0, window_bounds = array<i64: 1, 8, 32>}, {transform_indices = @transform_1, window_bounds = array<i64: 1, 8, 32>}, {transform_indices = @transform_2, window_bounds = array<i64: 1, 8, 32>}, {transform_indices = @transform_3, window_bounds = array<i64: 1, 4, 8, 8>}, {transform_indices = @transform_4, window_bounds = array<i64: 1, 8, 32>}]} {
    %c0 = arith.constant 0 : index
    %c0_0 = arith.constant 0 : index
    %c0_1 = arith.constant 0 : index
    %0 = vector.load %arg2[%c0, %c0_0, %c0_1] : memref<1x8x32xbf16, #tpu.memory_space<vmem>>, vector<1x8x32xbf16>
    %1 = vector.shape_cast %0 : vector<1x8x32xbf16> to vector<8x32xbf16>
    %c0_2 = arith.constant 0 : index
    %c0_3 = arith.constant 0 : index
    %c0_4 = arith.constant 0 : index
    %2 = vector.load %arg3[%c0_2, %c0_3, %c0_4] : memref<1x8x32xbf16, #tpu.memory_space<vmem>>, vector<1x8x32xbf16>
    %3 = vector.shape_cast %2 : vector<1x8x32xbf16> to vector<8x32xbf16>
    %c0_5 = arith.constant 0 : index
    %c0_6 = arith.constant 0 : index
    %c0_7 = arith.constant 0 : index
    %4 = vector.load %arg4[%c0_5, %c0_6, %c0_7] : memref<1x8x32xbf16, #tpu.memory_space<vmem>>, vector<1x8x32xbf16>
    %5 = vector.shape_cast %4 : vector<1x8x32xbf16> to vector<8x32xbf16>
    %6 = vector.extract_strided_slice %1 {offsets = [0, 0], sizes = [8, 8], strides = [1, 1]} : vector<8x32xbf16> to vector<8x8xbf16>
    %7 = vector.extract_strided_slice %3 {offsets = [0, 0], sizes = [8, 8], strides = [1, 1]} : vector<8x32xbf16> to vector<8x8xbf16>
    %8 = vector.extract_strided_slice %5 {offsets = [0, 0], sizes = [8, 8], strides = [1, 1]} : vector<8x32xbf16> to vector<8x8xbf16>
    %cst = arith.constant dense<0.000000e+00> : vector<8x8xf32>
    %9 = tpu.matmul %6, %7, %cst {dimension_numbers = #tpu.dot_dimension_numbers<[1], [1], [0], [0], [0, 0, 1, 0], [], []>} : vector<8x8xbf16>, vector<8x8xbf16>, vector<8x8xf32> -> vector<8x8xf32>
    %cst_8 = arith.constant dense<0xFF800000> : vector<8xf32>
    %10 = vector.multi_reduction <maximumf>, %9, %cst_8 [1] : vector<8x8xf32> to vector<8xf32>
    %11 = vector.shape_cast %10 : vector<8xf32> to vector<8x1xf32>
    %12 = vector.broadcast %11 : vector<8x1xf32> to vector<8x8xf32>
    %13 = arith.subf %9, %12 : vector<8x8xf32>
    %14 = math.exp %13 : vector<8x8xf32>
    %cst_9 = arith.constant dense<0.000000e+00> : vector<8xf32>
    %15 = vector.multi_reduction <add>, %14, %cst_9 [1] : vector<8x8xf32> to vector<8xf32>
    %16 = vector.shape_cast %15 : vector<8xf32> to vector<8x1xf32>
    %17 = tpu.reciprocal %16 {approx = true} : vector<8x1xf32> -> vector<8x1xf32>
    %18 = vector.broadcast %17 : vector<8x1xf32> to vector<8x8xf32>
    %19 = arith.mulf %14, %18 : vector<8x8xf32>
    %c0_10 = arith.constant 0 : index
    %c0_11 = arith.constant 0 : index
    %c0_12 = arith.constant 0 : index
    %c0_13 = arith.constant 0 : index
    %20 = vector.load %arg5[%c0_10, %c0_11, %c0_12, %c0_13] : memref<1x4x8x8xf32, #tpu.memory_space<vmem>>, vector<1x1x8x8xf32>
    %21 = vector.shape_cast %20 : vector<1x1x8x8xf32> to vector<8x8xf32>
    %22 = vector.shape_cast %19 : vector<8x8xf32> to vector<1x1x8x8xf32>
    tpu.vector_store %arg5[%c0_10, %c0_11, %c0_12, %c0_13], %22 {strides = array<i32>} : memref<1x4x8x8xf32, #tpu.memory_space<vmem>>, vector<1x1x8x8xf32>,
    %23 = arith.truncf %19 : vector<8x8xf32> to vector<8x8xbf16>
    %cst_14 = arith.constant dense<0.000000e+00> : vector<8x8xf32>
    %24 = tpu.matmul %23, %8, %cst_14 {dimension_numbers = #tpu.dot_dimension_numbers<[1], [0], [0], [1], [0, 0, 1, 1], [], []>} : vector<8x8xbf16>, vector<8x8xbf16>, vector<8x8xf32> -> vector<8x8xf32>
    %25 = vector.extract_strided_slice %1 {offsets = [0, 8], sizes = [8, 8], strides = [1, 1]} : vector<8x32xbf16> to vector<8x8xbf16>
    %26 = vector.extract_strided_slice %3 {offsets = [0, 8], sizes = [8, 8], strides = [1, 1]} : vector<8x32xbf16> to vector<8x8xbf16>
    %27 = vector.extract_strided_slice %5 {offsets = [0, 8], sizes = [8, 8], strides = [1, 1]} : vector<8x32xbf16> to vector<8x8xbf16>
    %cst_15 = arith.constant dense<0.000000e+00> : vector<8x8xf32>
    %28 = tpu.matmul %25, %26, %cst_15 {dimension_numbers = #tpu.dot_dimension_numbers<[1], [1], [0], [0], [0, 0, 1, 0], [], []>} : vector<8x8xbf16>, vector<8x8xbf16>, vector<8x8xf32> -> vector<8x8xf32>
    %cst_16 = arith.constant dense<0xFF800000> : vector<8xf32>
    %29 = vector.multi_reduction <maximumf>, %28, %cst_16 [1] : vector<8x8xf32> to vector<8xf32>
    %30 = vector.shape_cast %29 : vector<8xf32> to vector<8x1xf32>
    %31 = vector.broadcast %30 : vector<8x1xf32> to vector<8x8xf32>
    %32 = arith.subf %28, %31 : vector<8x8xf32>
    %33 = math.exp %32 : vector<8x8xf32>
    %cst_17 = arith.constant dense<0.000000e+00> : vector<8xf32>
    %34 = vector.multi_reduction <add>, %33, %cst_17 [1] : vector<8x8xf32> to vector<8xf32>
    %35 = vector.shape_cast %34 : vector<8xf32> to vector<8x1xf32>
    %36 = tpu.reciprocal %35 {approx = true} : vector<8x1xf32> -> vector<8x1xf32>
    %37 = vector.broadcast %36 : vector<8x1xf32> to vector<8x8xf32>
    %38 = arith.mulf %33, %37 : vector<8x8xf32>
    %c0_18 = arith.constant 0 : index
    %c1 = arith.constant 1 : index
    %c0_19 = arith.constant 0 : index
    %c0_20 = arith.constant 0 : index
    %39 = vector.load %arg5[%c0_18, %c1, %c0_19, %c0_20] : memref<1x4x8x8xf32, #tpu.memory_space<vmem>>, vector<1x1x8x8xf32>
    %40 = vector.shape_cast %39 : vector<1x1x8x8xf32> to vector<8x8xf32>
    %41 = vector.shape_cast %38 : vector<8x8xf32> to vector<1x1x8x8xf32>
    tpu.vector_store %arg5[%c0_18, %c1, %c0_19, %c0_20], %41 {strides = array<i32>} : memref<1x4x8x8xf32, #tpu.memory_space<vmem>>, vector<1x1x8x8xf32>,
    %42 = arith.truncf %38 : vector<8x8xf32> to vector<8x8xbf16>
    %cst_21 = arith.constant dense<0.000000e+00> : vector<8x8xf32>
    %43 = tpu.matmul %42, %27, %cst_21 {dimension_numbers = #tpu.dot_dimension_numbers<[1], [0], [0], [1], [0, 0, 1, 1], [], []>} : vector<8x8xbf16>, vector<8x8xbf16>, vector<8x8xf32> -> vector<8x8xf32>
    %44 = vector.extract_strided_slice %1 {offsets = [0, 16], sizes = [8, 8], strides = [1, 1]} : vector<8x32xbf16> to vector<8x8xbf16>
    %45 = vector.extract_strided_slice %3 {offsets = [0, 16], sizes = [8, 8], strides = [1, 1]} : vector<8x32xbf16> to vector<8x8xbf16>
    %46 = vector.extract_strided_slice %5 {offsets = [0, 16], sizes = [8, 8], strides = [1, 1]} : vector<8x32xbf16> to vector<8x8xbf16>
    %cst_22 = arith.constant dense<0.000000e+00> : vector<8x8xf32>
    %47 = tpu.matmul %44, %45, %cst_22 {dimension_numbers = #tpu.dot_dimension_numbers<[1], [1], [0], [0], [0, 0, 1, 0], [], []>} : vector<8x8xbf16>, vector<8x8xbf16>, vector<8x8xf32> -> vector<8x8xf32>
    %cst_23 = arith.constant dense<0xFF800000> : vector<8xf32>
    %48 = vector.multi_reduction <maximumf>, %47, %cst_23 [1] : vector<8x8xf32> to vector<8xf32>
    %49 = vector.shape_cast %48 : vector<8xf32> to vector<8x1xf32>
    %50 = vector.broadcast %49 : vector<8x1xf32> to vector<8x8xf32>
    %51 = arith.subf %47, %50 : vector<8x8xf32>
    %52 = math.exp %51 : vector<8x8xf32>
    %cst_24 = arith.constant dense<0.000000e+00> : vector<8xf32>
    %53 = vector.multi_reduction <add>, %52, %cst_24 [1] : vector<8x8xf32> to vector<8xf32>
    %54 = vector.shape_cast %53 : vector<8xf32> to vector<8x1xf32>
    %55 = tpu.reciprocal %54 {approx = true} : vector<8x1xf32> -> vector<8x1xf32>
    %56 = vector.broadcast %55 : vector<8x1xf32> to vector<8x8xf32>
    %57 = arith.mulf %52, %56 : vector<8x8xf32>
    %c0_25 = arith.constant 0 : index
    %c2 = arith.constant 2 : index
    %c0_26 = arith.constant 0 : index
    %c0_27 = arith.constant 0 : index
    %58 = vector.load %arg5[%c0_25, %c2, %c0_26, %c0_27] : memref<1x4x8x8xf32, #tpu.memory_space<vmem>>, vector<1x1x8x8xf32>
    %59 = vector.shape_cast %58 : vector<1x1x8x8xf32> to vector<8x8xf32>
    %60 = vector.shape_cast %57 : vector<8x8xf32> to vector<1x1x8x8xf32>
    tpu.vector_store %arg5[%c0_25, %c2, %c0_26, %c0_27], %60 {strides = array<i32>} : memref<1x4x8x8xf32, #tpu.memory_space<vmem>>, vector<1x1x8x8xf32>,
    %61 = arith.truncf %57 : vector<8x8xf32> to vector<8x8xbf16>
    %cst_28 = arith.constant dense<0.000000e+00> : vector<8x8xf32>
    %62 = tpu.matmul %61, %46, %cst_28 {dimension_numbers = #tpu.dot_dimension_numbers<[1], [0], [0], [1], [0, 0, 1, 1], [], []>} : vector<8x8xbf16>, vector<8x8xbf16>, vector<8x8xf32> -> vector<8x8xf32>
    %63 = vector.extract_strided_slice %1 {offsets = [0, 24], sizes = [8, 8], strides = [1, 1]} : vector<8x32xbf16> to vector<8x8xbf16>
    %64 = vector.extract_strided_slice %3 {offsets = [0, 24], sizes = [8, 8], strides = [1, 1]} : vector<8x32xbf16> to vector<8x8xbf16>
    %65 = vector.extract_strided_slice %5 {offsets = [0, 24], sizes = [8, 8], strides = [1, 1]} : vector<8x32xbf16> to vector<8x8xbf16>
    %cst_29 = arith.constant dense<0.000000e+00> : vector<8x8xf32>
    %66 = tpu.matmul %63, %64, %cst_29 {dimension_numbers = #tpu.dot_dimension_numbers<[1], [1], [0], [0], [0, 0, 1, 0], [], []>} : vector<8x8xbf16>, vector<8x8xbf16>, vector<8x8xf32> -> vector<8x8xf32>
    %cst_30 = arith.constant dense<0xFF800000> : vector<8xf32>
    %67 = vector.multi_reduction <maximumf>, %66, %cst_30 [1] : vector<8x8xf32> to vector<8xf32>
    %68 = vector.shape_cast %67 : vector<8xf32> to vector<8x1xf32>
    %69 = vector.broadcast %68 : vector<8x1xf32> to vector<8x8xf32>
    %70 = arith.subf %66, %69 : vector<8x8xf32>
    %71 = math.exp %70 : vector<8x8xf32>
    %cst_31 = arith.constant dense<0.000000e+00> : vector<8xf32>
    %72 = vector.multi_reduction <add>, %71, %cst_31 [1] : vector<8x8xf32> to vector<8xf32>
    %73 = vector.shape_cast %72 : vector<8xf32> to vector<8x1xf32>
    %74 = tpu.reciprocal %73 {approx = true} : vector<8x1xf32> -> vector<8x1xf32>
    %75 = vector.broadcast %74 : vector<8x1xf32> to vector<8x8xf32>
    %76 = arith.mulf %71, %75 : vector<8x8xf32>
    %c0_32 = arith.constant 0 : index
    %c3 = arith.constant 3 : index
    %c0_33 = arith.constant 0 : index
    %c0_34 = arith.constant 0 : index
    %77 = vector.load %arg5[%c0_32, %c3, %c0_33, %c0_34] : memref<1x4x8x8xf32, #tpu.memory_space<vmem>>, vector<1x1x8x8xf32>
    %78 = vector.shape_cast %77 : vector<1x1x8x8xf32> to vector<8x8xf32>
    %79 = vector.shape_cast %76 : vector<8x8xf32> to vector<1x1x8x8xf32>
    tpu.vector_store %arg5[%c0_32, %c3, %c0_33, %c0_34], %79 {strides = array<i32>} : memref<1x4x8x8xf32, #tpu.memory_space<vmem>>, vector<1x1x8x8xf32>,
    %80 = arith.truncf %76 : vector<8x8xf32> to vector<8x8xbf16>
    %cst_35 = arith.constant dense<0.000000e+00> : vector<8x8xf32>
    %81 = tpu.matmul %80, %65, %cst_35 {dimension_numbers = #tpu.dot_dimension_numbers<[1], [0], [0], [1], [0, 0, 1, 1], [], []>} : vector<8x8xbf16>, vector<8x8xbf16>, vector<8x8xf32> -> vector<8x8xf32>
    %82 = tpu.concatenate %24, %43, %62, %81 in 1 : vector<8x8xf32>, vector<8x8xf32>, vector<8x8xf32>, vector<8x8xf32> -> vector<8x32xf32>
    %83 = arith.truncf %82 : vector<8x32xf32> to vector<8x32xbf16>
    %c0_36 = arith.constant 0 : index
    %c0_37 = arith.constant 0 : index
    %c0_38 = arith.constant 0 : index
    %84 = vector.load %arg6[%c0_36, %c0_37, %c0_38] : memref<1x8x32xbf16, #tpu.memory_space<vmem>>, vector<1x8x32xbf16>
    %85 = vector.shape_cast %84 : vector<1x8x32xbf16> to vector<8x32xbf16>
    %86 = vector.shape_cast %83 : vector<8x32xbf16> to vector<1x8x32xbf16>
    tpu.vector_store %arg6[%c0_36, %c0_37, %c0_38], %86 {strides = array<i32>} : memref<1x8x32xbf16, #tpu.memory_space<vmem>>, vector<1x8x32xbf16>,
    return
  }
  func.func @transform_0(%arg0: i32, %arg1: i32) -> (i32, i32, i32) {
    %c0_i32 = arith.constant 0 : i32
    %c0_i32_0 = arith.constant 0 : i32
    return %arg0, %arg1, %c0_i32 : i32, i32, i32
  }
  func.func @transform_1(%arg0: i32, %arg1: i32) -> (i32, i32, i32) {
    %c0_i32 = arith.constant 0 : i32
    %c0_i32_0 = arith.constant 0 : i32
    %c0_i32_1 = arith.constant 0 : i32
    return %arg0, %c0_i32, %c0_i32_0 : i32, i32, i32
  }
  func.func @transform_2(%arg0: i32, %arg1: i32) -> (i32, i32, i32) {
    %c0_i32 = arith.constant 0 : i32
    %c0_i32_0 = arith.constant 0 : i32
    %c0_i32_1 = arith.constant 0 : i32
    return %arg0, %c0_i32, %c0_i32_0 : i32, i32, i32
  }
  func.func @transform_3(%arg0: i32, %arg1: i32) -> (i32, i32, i32, i32) {
    %c0_i32 = arith.constant 0 : i32
    %c0_i32_0 = arith.constant 0 : i32
    %c0_i32_1 = arith.constant 0 : i32
    return %arg0, %c0_i32, %arg1, %c0_i32_0 : i32, i32, i32, i32
  }
  func.func @transform_4(%arg0: i32, %arg1: i32) -> (i32, i32, i32) {
    %c0_i32 = arith.constant 0 : i32
    %c0_i32_0 = arith.constant 0 : i32
    return %arg0, %arg1, %c0_i32 : i32, i32, i32
  }
}

</mosaic_0001>

<llo_original>
// kernel: mhca_forward.9
$region0: #{mhca_forward.9}
  #allocation0 [shape = 'u32[]', space=smem, size = 0x4, offset = 0x4, fixed_abs, tag = 'smem constant byte address 0x4 - core index']
  #allocation1 [shape = 'u32[144,128]{1,0:T(1,128)}', space=vmem, size = 0x12000, scoped, tag = 'internal scratch']
  #allocation2 [shape = 'f32[16,128]{1,0:T(8,128)}', space=vmem, size = 0x2000, scoped, tag = 'scratch operand']
  %s0 = inlined_call_operand.vmem [shape: bf16[16,128], index: 0, kind: input, shape index: {}]
  %s1 = inlined_call_operand.vmem [shape: bf16[128,128], index: 1, kind: input, shape index: {}]
  %s2 = inlined_call_operand.vmem [shape: f32[1,128], index: 2, kind: input, shape index: {}]
  %s3 = inlined_call_operand.vmem [shape: f32[16,128], index: 3, kind: output, shape index: {}]
  %s4 = sld [smem:[#allocation0]]
  $region30: #{mhca_forward.9} parent=0
    _
  %s6 = ssub.s32 1, %s4
  %s7 = scalar_select 0, %s6, %s4
  // Predicated region
  $region2: #{mhca_forward.9} parent=0 // pred_check
    _
  $region3: #{mhca_forward.9} parent=0 // pred_check_branch
    %9 = sbr.rel (0) target = $region5
  $region4: #{mhca_forward.9} parent=0 // pred_region
    _
  $region5: #{mhca_forward.9} parent=0 // pred_fallthru
    _
  // Predicated region
  $region6: #{mhca_forward.9} parent=0 // pred_check
    _
  $region7: #{mhca_forward.9} parent=0 // pred_check_branch
    %11 = sbr.rel (0) target = $region9
  $region8: #{mhca_forward.9} parent=0 // pred_region
    _
  $region9: #{mhca_forward.9} parent=0 // pred_fallthru
    _
  // Predicated region
  $region10: #{mhca_forward.9} parent=0 // pred_check
    _
  $region11: #{mhca_forward.9} parent=0 // pred_check_branch
    %13 = sbr.rel (0) target = $region13
  $region12: #{mhca_forward.9} parent=0 // pred_region
    _
  $region13: #{mhca_forward.9} parent=0 // pred_fallthru
    _
  %p15 = scmp.eq.s32.totalorder 0, 0
  // Predicated region
  $region14: #{mhca_forward.9} parent=0 // pred_check
    %p16 = pneg %p15
  $region15: #{mhca_forward.9} parent=0 // pred_check_branch
    %18 = sbr.rel (%p16) target = $region17
  $region16: #{mhca_forward.9} parent=0 // pred_region
    %19 = vst [vmem:[#allocation2] sm:$0xff] 0.0
    %20 = vst [vmem:[#allocation2 + $0x8] sm:$0xff] 0.0
  $region17: #{mhca_forward.9} parent=0 // pred_fallthru
    _
  %v21 = vld [vmem:[#allocation2] sm:$0xff]
  %v22 = vld [vmem:[#allocation2 + $0x8] sm:$0xff]
  %v23 = vld [vmem:[%s0] sm:$0xf]
  %v24 = vld [vmem:[%s0 + $0x4] sm:$0xf]
  %v25 = vld [vmem:[%s1] sm:$0xf]
  %v26 = vld [vmem:[%s1 + $0x4] sm:$0xf]
  %v27 = vld [vmem:[%s1 + $0x8] sm:$0xf]
  %v28 = vld [vmem:[%s1 + $0xc] sm:$0xf]
  %v29 = vld [vmem:[%s1 + $0x10] sm:$0xf]
  %v30 = vld [vmem:[%s1 + $0x14] sm:$0xf]
  %v31 = vld [vmem:[%s1 + $0x18] sm:$0xf]
  %v32 = vld [vmem:[%s1 + $0x1c] sm:$0xf]
  %v33 = vld [vmem:[%s1 + $0x20] sm:$0xf]
  %v34 = vld [vmem:[%s1 + $0x24] sm:$0xf]
  %v35 = vld [vmem:[%s1 + $0x28] sm:$0xf]
  %v36 = vld [vmem:[%s1 + $0x2c] sm:$0xf]
  %v37 = vld [vmem:[%s1 + $0x30] sm:$0xf]
  %v38 = vld [vmem:[%s1 + $0x34] sm:$0xf]
  %v39 = vld [vmem:[%s1 + $0x38] sm:$0xf]
  %v40 = vld [vmem:[%s1 + $0x3c] sm:$0xf]
  %v43 = vunpack.c.l.b16 %v23
  %v44 = vunpack.c.l.b16 %v24
  %v45 = vpack.c.b16 %v44, %v43
  %v63 = vunpack.c.l.b16 %v25
  %v64 = vunpack.c.l.b16 %v26
  %v65 = vunpack.c.l.b16 %v27
  %v66 = vunpack.c.l.b16 %v28
  %v67 = vunpack.c.l.b16 %v29
  %v68 = vunpack.c.l.b16 %v30
  %v69 = vunpack.c.l.b16 %v31
  %v70 = vunpack.c.l.b16 %v32
  %v71 = vunpack.c.l.b16 %v33
  %v72 = vunpack.c.l.b16 %v34
  %v73 = vunpack.c.l.b16 %v35
  %v74 = vunpack.c.l.b16 %v36
  %v75 = vunpack.c.l.b16 %v37
  %v76 = vunpack.c.l.b16 %v38
  %v77 = vunpack.c.l.b16 %v39
  %v78 = vunpack.c.l.b16 %v40
  %v79 = vpack.c.b16 %v64, %v63
  %v80 = vpack.c.b16 %v66, %v65
  %v81 = vpack.c.b16 %v68, %v67
  %v82 = vpack.c.b16 %v70, %v69
  %v83 = vpack.c.b16 %v72, %v71
  %v84 = vpack.c.b16 %v74, %v73
  %v85 = vpack.c.b16 %v76, %v75
  %v86 = vpack.c.b16 %v78, %v77
  %95 = vmatprep.subr.bf16.mxu0 0
  %96 = vmatpush1.bf16.msra.mxu0 %v79
  %97 = vmatprep.subr.bf16.mxu0 0
  %98 = vmatpush1.bf16.msra.mxu0 %v80
  %99 = vmatprep.subr.bf16.mxu0 0
  %100 = vmatpush1.bf16.msra.mxu0 %v81
  %101 = vmatprep.subr.bf16.mxu0 0
  %102 = vmatpush1.bf16.msra.mxu0 %v82
  %103 = vmatprep.subr.bf16.mxu0 0
  %104 = vmatpush1.bf16.msra.mxu0 %v83
  %105 = vmatprep.subr.bf16.mxu0 0
  %106 = vmatpush1.bf16.msra.mxu0 %v84
  %107 = vmatprep.subr.bf16.mxu0 0
  %108 = vmatpush1.bf16.msra.mxu0 %v85
  %109 = vmatprep.subr.bf16.mxu0 0
  %110 = vmatpush1.bf16.msra.mxu0 %v86
  %111 = vmatprep.subr.bf16.mxu0 0
  %112 = vmatpush1.bf16.msra.mxu0 0
  %113 = vmatprep.subr.bf16.mxu0 0
  %114 = vmatpush1.bf16.msra.mxu0 0
  %115 = vmatprep.subr.bf16.mxu0 0
  %116 = vmatpush1.bf16.msra.mxu0 0
  %117 = vmatprep.subr.bf16.mxu0 0
  %118 = vmatpush1.bf16.msra.mxu0 0
  %119 = vmatprep.subr.bf16.mxu0 0
  %120 = vmatpush1.bf16.msra.mxu0 0
  %121 = vmatprep.subr.bf16.mxu0 0
  %122 = vmatpush1.bf16.msra.mxu0 0
  %123 = vmatprep.subr.bf16.mxu0 0
  %124 = vmatpush1.bf16.msra.mxu0 0
  %125 = vmatprep.subr.bf16.mxu0 0
  %126 = vmatpush1.bf16.msra.mxu0 0
  %127 = vmatprep.mubr.bf16.mxu0 0
  %128 = vmatmul.mubr.bf16.gmra.mrb[0].mxu0 %v45
  %v129 = vpop.f32.mrb[0].mxu0
  %v130 = vadd.f32 0.0, %v129
  %v131 = vpop.f32.mrb[0].mxu0
  %v132 = vpop.f32.mrb[0].mxu0
  %v133 = vadd.f32 0.0, %v132
  %v134 = vpop.f32.mrb[0].mxu0
  %135 = vdwg.mxu0
  %v136 = vadd.f32 %v21, %v130
  %v137 = vadd.f32 %v22, %v133
  %138 = vst [vmem:[#allocation2] sm:$0xff] %v136
  %139 = vst [vmem:[#allocation2 + $0x8] sm:$0xff] %v137
  // Predicated region
  $region18: #{mhca_forward.9} parent=0 // pred_check
    %p140 = pneg %p15
  $region19: #{mhca_forward.9} parent=0 // pred_check_branch
    %142 = sbr.rel (%p140) target = $region21
  $region20: #{mhca_forward.9} parent=0 // pred_region
    %v143 = vld [vmem:[#allocation2] sm:$0xff]
    %v144 = vld [vmem:[#allocation2 + $0x8] sm:$0xff]
    %v145 = vld [vmem:[%s2] sm:$0x1]
    %v147 = vlaneseq
    %v148 = vshrl.u32 %v147, 7
    %v149 = vsub.s32 0, %v148
    %v150 = vrot.slane %v145, %v149
    %v152 = vadd.f32 %v143, %v150
    %v153 = vadd.f32 %v144, %v150
    %154 = vst [vmem:[%s3] sm:$0xff] %v152
    %155 = vst [vmem:[%s3 + $0x8] sm:$0xff] %v153
  $region21: #{mhca_forward.9} parent=0 // pred_fallthru
    _
  // Predicated region
  $region22: #{mhca_forward.9} parent=0 // pred_check
    _
  $region23: #{mhca_forward.9} parent=0 // pred_check_branch
    %157 = sbr.rel (0) target = $region25
  $region24: #{mhca_forward.9} parent=0 // pred_region
    _
  $region25: #{mhca_forward.9} parent=0 // pred_fallthru
    _
  // Predicated region
  $region26: #{mhca_forward.9} parent=0 // pred_check
    _
  $region27: #{mhca_forward.9} parent=0 // pred_check_branch
    %159 = sbr.rel (0) target = $region29
  $region28: #{mhca_forward.9} parent=0 // pred_region
    _
  $region29: #{mhca_forward.9} parent=0 // pred_fallthru
    _

// kernel: mhca_forward.6
$region0: #{mhca_forward.6}
  #allocation0 [shape = 'u32[]', space=smem, size = 0x4, offset = 0x4, fixed_abs, tag = 'smem constant byte address 0x4 - core index']
  #allocation1 [shape = 'u32[144,128]{1,0:T(1,128)}', space=vmem, size = 0x12000, scoped, tag = 'internal scratch']
  #allocation2 [shape = 'f32[16,128]{1,0:T(8,128)}', space=vmem, size = 0x2000, scoped, tag = 'scratch operand']
  %s0 = inlined_call_operand.vmem [shape: bf16[16,128], index: 0, kind: input, shape index: {}]
  %s1 = inlined_call_operand.vmem [shape: bf16[128,128], index: 1, kind: input, shape index: {}]
  %s2 = inlined_call_operand.vmem [shape: f32[1,128], index: 2, kind: input, shape index: {}]
  %s3 = inlined_call_operand.vmem [shape: bf16[16,128], index: 3, kind: output, shape index: {}]
  %s4 = sld [smem:[#allocation0]]
  $region30: #{mhca_forward.6} parent=0
    _
  %s6 = ssub.s32 1, %s4
  %s7 = scalar_select 0, %s6, %s4
  // Predicated region
  $region2: #{mhca_forward.6} parent=0 // pred_check
    _
  $region3: #{mhca_forward.6} parent=0 // pred_check_branch
    %9 = sbr.rel (0) target = $region5
  $region4: #{mhca_forward.6} parent=0 // pred_region
    _
  $region5: #{mhca_forward.6} parent=0 // pred_fallthru
    _
  // Predicated region
  $region6: #{mhca_forward.6} parent=0 // pred_check
    _
  $region7: #{mhca_forward.6} parent=0 // pred_check_branch
    %11 = sbr.rel (0) target = $region9
  $region8: #{mhca_forward.6} parent=0 // pred_region
    _
  $region9: #{mhca_forward.6} parent=0 // pred_fallthru
    _
  // Predicated region
  $region10: #{mhca_forward.6} parent=0 // pred_check
    _
  $region11: #{mhca_forward.6} parent=0 // pred_check_branch
    %13 = sbr.rel (0) target = $region13
  $region12: #{mhca_forward.6} parent=0 // pred_region
    _
  $region13: #{mhca_forward.6} parent=0 // pred_fallthru
    _
  %p15 = scmp.eq.s32.totalorder 0, 0
  // Predicated region
  $region14: #{mhca_forward.6} parent=0 // pred_check
    %p16 = pneg %p15
  $region15: #{mhca_forward.6} parent=0 // pred_check_branch
    %18 = sbr.rel (%p16) target = $region17
  $region16: #{mhca_forward.6} parent=0 // pred_region
    %19 = vst [vmem:[#allocation2] sm:$0xff] 0.0
    %20 = vst [vmem:[#allocation2 + $0x8] sm:$0xff] 0.0
  $region17: #{mhca_forward.6} parent=0 // pred_fallthru
    _
  %v21 = vld [vmem:[#allocation2] sm:$0xff]
  %v22 = vld [vmem:[#allocation2 + $0x8] sm:$0xff]
  %v23 = vld [vmem:[%s0] sm:$0xf]
  %v24 = vld [vmem:[%s0 + $0x4] sm:$0xf]
  %v25 = vld [vmem:[%s1] sm:$0xf]
  %v26 = vld [vmem:[%s1 + $0x4] sm:$0xf]
  %v27 = vld [vmem:[%s1 + $0x8] sm:$0xf]
  %v28 = vld [vmem:[%s1 + $0xc] sm:$0xf]
  %v29 = vld [vmem:[%s1 + $0x10] sm:$0xf]
  %v30 = vld [vmem:[%s1 + $0x14] sm:$0xf]
  %v31 = vld [vmem:[%s1 + $0x18] sm:$0xf]
  %v32 = vld [vmem:[%s1 + $0x1c] sm:$0xf]
  %v33 = vld [vmem:[%s1 + $0x20] sm:$0xf]
  %v34 = vld [vmem:[%s1 + $0x24] sm:$0xf]
  %v35 = vld [vmem:[%s1 + $0x28] sm:$0xf]
  %v36 = vld [vmem:[%s1 + $0x2c] sm:$0xf]
  %v37 = vld [vmem:[%s1 + $0x30] sm:$0xf]
  %v38 = vld [vmem:[%s1 + $0x34] sm:$0xf]
  %v39 = vld [vmem:[%s1 + $0x38] sm:$0xf]
  %v40 = vld [vmem:[%s1 + $0x3c] sm:$0xf]
  %v43 = vunpack.c.l.b16 %v23
  %v44 = vunpack.c.l.b16 %v24
  %v45 = vpack.c.b16 %v44, %v43
  %v63 = vunpack.c.l.b16 %v25
  %v64 = vunpack.c.l.b16 %v26
  %v65 = vunpack.c.l.b16 %v27
  %v66 = vunpack.c.l.b16 %v28
  %v67 = vunpack.c.l.b16 %v29
  %v68 = vunpack.c.l.b16 %v30
  %v69 = vunpack.c.l.b16 %v31
  %v70 = vunpack.c.l.b16 %v32
  %v71 = vunpack.c.l.b16 %v33
  %v72 = vunpack.c.l.b16 %v34
  %v73 = vunpack.c.l.b16 %v35
  %v74 = vunpack.c.l.b16 %v36
  %v75 = vunpack.c.l.b16 %v37
  %v76 = vunpack.c.l.b16 %v38
  %v77 = vunpack.c.l.b16 %v39
  %v78 = vunpack.c.l.b16 %v40
  %v79 = vpack.c.b16 %v64, %v63
  %v80 = vpack.c.b16 %v66, %v65
  %v81 = vpack.c.b16 %v68, %v67
  %v82 = vpack.c.b16 %v70, %v69
  %v83 = vpack.c.b16 %v72, %v71
  %v84 = vpack.c.b16 %v74, %v73
  %v85 = vpack.c.b16 %v76, %v75
  %v86 = vpack.c.b16 %v78, %v77
  %95 = vmatprep.subr.bf16.mxu0 0
  %96 = vmatpush1.bf16.msra.mxu0 %v79
  %97 = vmatprep.subr.bf16.mxu0 0
  %98 = vmatpush1.bf16.msra.mxu0 %v80
  %99 = vmatprep.subr.bf16.mxu0 0
  %100 = vmatpush1.bf16.msra.mxu0 %v81
  %101 = vmatprep.subr.bf16.mxu0 0
  %102 = vmatpush1.bf16.msra.mxu0 %v82
  %103 = vmatprep.subr.bf16.mxu0 0
  %104 = vmatpush1.bf16.msra.mxu0 %v83
  %105 = vmatprep.subr.bf16.mxu0 0
  %106 = vmatpush1.bf16.msra.mxu0 %v84
  %107 = vmatprep.subr.bf16.mxu0 0
  %108 = vmatpush1.bf16.msra.mxu0 %v85
  %109 = vmatprep.subr.bf16.mxu0 0
  %110 = vmatpush1.bf16.msra.mxu0 %v86
  %111 = vmatprep.subr.bf16.mxu0 0
  %112 = vmatpush1.bf16.msra.mxu0 0
  %113 = vmatprep.subr.bf16.mxu0 0
  %114 = vmatpush1.bf16.msra.mxu0 0
  %115 = vmatprep.subr.bf16.mxu0 0
  %116 = vmatpush1.bf16.msra.mxu0 0
  %117 = vmatprep.subr.bf16.mxu0 0
  %118 = vmatpush1.bf16.msra.mxu0 0
  %119 = vmatprep.subr.bf16.mxu0 0
  %120 = vmatpush1.bf16.msra.mxu0 0
  %121 = vmatprep.subr.bf16.mxu0 0
  %122 = vmatpush1.bf16.msra.mxu0 0
  %123 = vmatprep.subr.bf16.mxu0 0
  %124 = vmatpush1.bf16.msra.mxu0 0
  %125 = vmatprep.subr.bf16.mxu0 0
  %126 = vmatpush1.bf16.msra.mxu0 0
  %127 = vmatprep.mubr.bf16.mxu0 0
  %128 = vmatmul.mubr.bf16.gmra.mrb[0].mxu0 %v45
  %v129 = vpop.f32.mrb[0].mxu0
  %v130 = vadd.f32 0.0, %v129
  %v131 = vpop.f32.mrb[0].mxu0
  %v132 = vpop.f32.mrb[0].mxu0
  %v133 = vadd.f32 0.0, %v132
  %v134 = vpop.f32.mrb[0].mxu0
  %135 = vdwg.mxu0
  %v136 = vadd.f32 %v21, %v130
  %v137 = vadd.f32 %v22, %v133
  %138 = vst [vmem:[#allocation2] sm:$0xff] %v136
  %139 = vst [vmem:[#allocation2 + $0x8] sm:$0xff] %v137
  // Predicated region
  $region18: #{mhca_forward.6} parent=0 // pred_check
    %p140 = pneg %p15
  $region19: #{mhca_forward.6} parent=0 // pred_check_branch
    %142 = sbr.rel (%p140) target = $region21
  $region20: #{mhca_forward.6} parent=0 // pred_region
    %v143 = vld [vmem:[#allocation2] sm:$0xff]
    %v144 = vld [vmem:[#allocation2 + $0x8] sm:$0xff]
    %v145 = vld [vmem:[%s2] sm:$0x1]
    %v147 = vlaneseq
    %v148 = vshrl.u32 %v147, 7
    %v149 = vsub.s32 0, %v148
    %v150 = vrot.slane %v145, %v149
    %v152 = vadd.f32 %v143, %v150
    %v153 = vadd.f32 %v144, %v150
    %v154 = vpack.c.bf16 %v153, %v152
    %v156 = vunpack.c.l.b16 %v154
    %v157 = vunpack.c.h.b16 %v154
    %v158 = vpack.c.b16 %v156, %v156
    %v159 = vpack.c.b16 %v157, %v157
    %162 = vst [vmem:[%s3] sm:$0xf] %v158
    %163 = vst [vmem:[%s3 + $0x4] sm:$0xf] %v159
  $region21: #{mhca_forward.6} parent=0 // pred_fallthru
    _
  // Predicated region
  $region22: #{mhca_forward.6} parent=0 // pred_check
    _
  $region23: #{mhca_forward.6} parent=0 // pred_check_branch
    %165 = sbr.rel (0) target = $region25
  $region24: #{mhca_forward.6} parent=0 // pred_region
    _
  $region25: #{mhca_forward.6} parent=0 // pred_fallthru
    _
  // Predicated region
  $region26: #{mhca_forward.6} parent=0 // pred_check
    _
  $region27: #{mhca_forward.6} parent=0 // pred_check_branch
    %167 = sbr.rel (0) target = $region29
  $region28: #{mhca_forward.6} parent=0 // pred_region
    _
  $region29: #{mhca_forward.6} parent=0 // pred_fallthru
    _

// kernel: mhca_forward.5
$region0: #{mhca_forward.5}
  #allocation0 [shape = 'u32[]', space=smem, size = 0x4, offset = 0x4, fixed_abs, tag = 'smem constant byte address 0x4 - core index']
  #allocation1 [shape = 'u32[144,128]{1,0:T(1,128)}', space=vmem, size = 0x12000, scoped, tag = 'internal scratch']
  #allocation2 [shape = 'f32[16,128]{1,0:T(8,128)}', space=vmem, size = 0x2000, scoped, tag = 'scratch operand']
  %s0 = inlined_call_operand.vmem [shape: bf16[16,128], index: 0, kind: input, shape index: {}]
  %s1 = inlined_call_operand.hbm [shape: bf16[128,128], index: 1, kind: input, shape index: {}]
  %s2 = inlined_call_operand.vmem [shape: f32[1,128], index: 2, kind: input, shape index: {}]
  %s3 = inlined_call_operand.vmem [shape: bf16[16,128], index: 3, kind: output, shape index: {}]
  %s4 = sld [smem:[#allocation0]]
  $region34: #{mhca_forward.5} parent=0
    _
  %s6 = ssub.s32 1, %s4
  %s7 = scalar_select 0, %s6, %s4
  $region1: #{mhca_forward.5} parent=0
    #allocation3 [shape = 'u8[32768]{0}', space=vmem, size = 0x8000, scoped, tag = 'input window, operand 1, single buffered']
    #allocation4 [shape = 's32[1]{0}', space=sflag, size = 0x4, scoped, tag = 'scoped memory for mhca_forward.5']
    %8 = vsyncpa [#allocation4], 0
    // Predicated region
    $region2: #{mhca_forward.5} parent=1 // pred_check
      _
    $region3: #{mhca_forward.5} parent=1 // pred_check_branch
      %10 = sbr.rel (0) target = $region5
    $region4: #{mhca_forward.5} parent=1 // pred_region
      _
    $region5: #{mhca_forward.5} parent=1 // pred_fallthru
      _
    // Predicated region
    $region6: #{mhca_forward.5} parent=1 // pred_check
      _
    $region7: #{mhca_forward.5} parent=1 // pred_check_branch
      %12 = sbr.rel (0) target = $region9
    $region8: #{mhca_forward.5} parent=1 // pred_region
      %s14 = ssub.s32 1024, 1024
      %15 = vsyncadd [#allocation4], %s14
      %s16 = sshll.u32 [#allocation3], 4
      %s17 = int_to_ptr.vmem [resolvable:$true] %s16
      %22 = dma.hbm_to_vmem [thread:$0]  %s1, 1024, %s17, [#allocation4], 64, 64, 4
    $region9: #{mhca_forward.5} parent=1 // pred_fallthru
      _
    // Predicated region
    $region10: #{mhca_forward.5} parent=1 // pred_check
      _
    $region11: #{mhca_forward.5} parent=1 // pred_check_branch
      %24 = sbr.rel (0) target = $region13
    $region12: #{mhca_forward.5} parent=1 // pred_region
      _
    $region13: #{mhca_forward.5} parent=1 // pred_fallthru
      _
    // Predicated region
    $region14: #{mhca_forward.5} parent=1 // pred_check
      _
    $region15: #{mhca_forward.5} parent=1 // pred_check_branch
      %26 = sbr.rel (0) target = $region17
    $region16: #{mhca_forward.5} parent=1 // pred_region
      %27 = dma.done [#allocation4], 1024
    $region17: #{mhca_forward.5} parent=1 // pred_fallthru
      _
    %p29 = scmp.eq.s32.totalorder 0, 0
    // Predicated region
    $region18: #{mhca_forward.5} parent=1 // pred_check
      %p30 = pneg %p29
    $region19: #{mhca_forward.5} parent=1 // pred_check_branch
      %32 = sbr.rel (%p30) target = $region21
    $region20: #{mhca_forward.5} parent=1 // pred_region
      %33 = vst [vmem:[#allocation2] sm:$0xff] 0.0
      %34 = vst [vmem:[#allocation2 + $0x8] sm:$0xff] 0.0
    $region21: #{mhca_forward.5} parent=1 // pred_fallthru
      _
    %v35 = vld [vmem:[#allocation2] sm:$0xff]
    %v36 = vld [vmem:[#allocation2 + $0x8] sm:$0xff]
    %v37 = vld [vmem:[%s0] sm:$0xf]
    %v38 = vld [vmem:[%s0 + $0x4] sm:$0xf]
    %v39 = vld [vmem:[#allocation3] sm:$0xf]
    %v40 = vld [vmem:[#allocation3 + $0x4] sm:$0xf]
    %v41 = vld [vmem:[#allocation3 + $0x8] sm:$0xf]
    %v42 = vld [vmem:[#allocation3 + $0xc] sm:$0xf]
    %v43 = vld [vmem:[#allocation3 + $0x10] sm:$0xf]
    %v44 = vld [vmem:[#allocation3 + $0x14] sm:$0xf]
    %v45 = vld [vmem:[#allocation3 + $0x18] sm:$0xf]
    %v46 = vld [vmem:[#allocation3 + $0x1c] sm:$0xf]
    %v47 = vld [vmem:[#allocation3 + $0x20] sm:$0xf]
    %v48 = vld [vmem:[#allocation3 + $0x24] sm:$0xf]
    %v49 = vld [vmem:[#allocation3 + $0x28] sm:$0xf]
    %v50 = vld [vmem:[#allocation3 + $0x2c] sm:$0xf]
    %v51 = vld [vmem:[#allocation3 + $0x30] sm:$0xf]
    %v52 = vld [vmem:[#allocation3 + $0x34] sm:$0xf]
    %v53 = vld [vmem:[#allocation3 + $0x38] sm:$0xf]
    %v54 = vld [vmem:[#allocation3 + $0x3c] sm:$0xf]
    %v57 = vunpack.c.l.b16 %v37
    %v58 = vunpack.c.l.b16 %v38
    %v59 = vpack.c.b16 %v58, %v57
    %v77 = vunpack.c.l.b16 %v39
    %v78 = vunpack.c.l.b16 %v40
    %v79 = vunpack.c.l.b16 %v41
    %v80 = vunpack.c.l.b16 %v42
    %v81 = vunpack.c.l.b16 %v43
    %v82 = vunpack.c.l.b16 %v44
    %v83 = vunpack.c.l.b16 %v45
    %v84 = vunpack.c.l.b16 %v46
    %v85 = vunpack.c.l.b16 %v47
    %v86 = vunpack.c.l.b16 %v48
    %v87 = vunpack.c.l.b16 %v49
    %v88 = vunpack.c.l.b16 %v50
    %v89 = vunpack.c.l.b16 %v51
    %v90 = vunpack.c.l.b16 %v52
    %v91 = vunpack.c.l.b16 %v53
    %v92 = vunpack.c.l.b16 %v54
    %v93 = vpack.c.b16 %v78, %v77
    %v94 = vpack.c.b16 %v80, %v79
    %v95 = vpack.c.b16 %v82, %v81
    %v96 = vpack.c.b16 %v84, %v83
    %v97 = vpack.c.b16 %v86, %v85
    %v98 = vpack.c.b16 %v88, %v87
    %v99 = vpack.c.b16 %v90, %v89
    %v100 = vpack.c.b16 %v92, %v91
    %109 = vmatprep.subr.bf16.mxu0 0
    %110 = vmatpush1.bf16.msra.mxu0 %v93
    %111 = vmatprep.subr.bf16.mxu0 0
    %112 = vmatpush1.bf16.msra.mxu0 %v94
    %113 = vmatprep.subr.bf16.mxu0 0
    %114 = vmatpush1.bf16.msra.mxu0 %v95
    %115 = vmatprep.subr.bf16.mxu0 0
    %116 = vmatpush1.bf16.msra.mxu0 %v96
    %117 = vmatprep.subr.bf16.mxu0 0
    %118 = vmatpush1.bf16.msra.mxu0 %v97
    %119 = vmatprep.subr.bf16.mxu0 0
    %120 = vmatpush1.bf16.msra.mxu0 %v98
    %121 = vmatprep.subr.bf16.mxu0 0
    %122 = vmatpush1.bf16.msra.mxu0 %v99
    %123 = vmatprep.subr.bf16.mxu0 0
    %124 = vmatpush1.bf16.msra.mxu0 %v100
    %125 = vmatprep.subr.bf16.mxu0 0
    %126 = vmatpush1.bf16.msra.mxu0 0
    %127 = vmatprep.subr.bf16.mxu0 0
    %128 = vmatpush1.bf16.msra.mxu0 0
    %129 = vmatprep.subr.bf16.mxu0 0
    %130 = vmatpush1.bf16.msra.mxu0 0
    %131 = vmatprep.subr.bf16.mxu0 0
    %132 = vmatpush1.bf16.msra.mxu0 0
    %133 = vmatprep.subr.bf16.mxu0 0
    %134 = vmatpush1.bf16.msra.mxu0 0
    %135 = vmatprep.subr.bf16.mxu0 0
    %136 = vmatpush1.bf16.msra.mxu0 0
    %137 = vmatprep.subr.bf16.mxu0 0
    %138 = vmatpush1.bf16.msra.mxu0 0
    %139 = vmatprep.subr.bf16.mxu0 0
    %140 = vmatpush1.bf16.msra.mxu0 0
    %141 = vmatprep.mubr.bf16.mxu0 0
    %142 = vmatmul.mubr.bf16.gmra.mrb[0].mxu0 %v59
    %v143 = vpop.f32.mrb[0].mxu0
    %v144 = vadd.f32 0.0, %v143
    %v145 = vpop.f32.mrb[0].mxu0
    %v146 = vpop.f32.mrb[0].mxu0
    %v147 = vadd.f32 0.0, %v146
    %v148 = vpop.f32.mrb[0].mxu0
    %149 = vdwg.mxu0
    %v150 = vadd.f32 %v35, %v144
    %v151 = vadd.f32 %v36, %v147
    %152 = vst [vmem:[#allocation2] sm:$0xff] %v150
    %153 = vst [vmem:[#allocation2 + $0x8] sm:$0xff] %v151
    // Predicated region
    $region22: #{mhca_forward.5} parent=1 // pred_check
      %p154 = pneg %p29
    $region23: #{mhca_forward.5} parent=1 // pred_check_branch
      %156 = sbr.rel (%p154) target = $region25
    $region24: #{mhca_forward.5} parent=1 // pred_region
      %v157 = vld [vmem:[#allocation2] sm:$0xff]
      %v158 = vld [vmem:[#allocation2 + $0x8] sm:$0xff]
      %v159 = vld [vmem:[%s2] sm:$0x1]
      %v161 = vlaneseq
      %v162 = vshrl.u32 %v161, 7
      %v163 = vsub.s32 0, %v162
      %v164 = vrot.slane %v159, %v163
      %v166 = vadd.f32 %v157, %v164
      %v167 = vadd.f32 %v158, %v164
      %v168 = vpack.c.bf16 %v167, %v166
      %v170 = vunpack.c.l.b16 %v168
      %v171 = vunpack.c.h.b16 %v168
      %v172 = vpack.c.b16 %v170, %v170
      %v173 = vpack.c.b16 %v171, %v171
      %176 = vst [vmem:[%s3] sm:$0xf] %v172
      %177 = vst [vmem:[%s3 + $0x4] sm:$0xf] %v173
    $region25: #{mhca_forward.5} parent=1 // pred_fallthru
      _
    // Predicated region
    $region26: #{mhca_forward.5} parent=1 // pred_check
      _
    $region27: #{mhca_forward.5} parent=1 // pred_check_branch
      %179 = sbr.rel (0) target = $region29
    $region28: #{mhca_forward.5} parent=1 // pred_region
      _
    $region29: #{mhca_forward.5} parent=1 // pred_fallthru
      _
    // Predicated region
    $region30: #{mhca_forward.5} parent=1 // pred_check
      _
    $region31: #{mhca_forward.5} parent=1 // pred_check_branch
      %181 = sbr.rel (0) target = $region33
    $region32: #{mhca_forward.5} parent=1 // pred_region
      _
    $region33: #{mhca_forward.5} parent=1 // pred_fallthru
      _
    %182 = vsyncpa [#allocation4], 1

// kernel: mhca_forward.8
$region0: #{mhca_forward.8}
  #allocation0 [shape = 'u32[]', space=smem, size = 0x4, offset = 0x4, fixed_abs, tag = 'smem constant byte address 0x4 - core index']
  #allocation1 [shape = 'u32[144,128]{1,0:T(1,128)}', space=vmem, size = 0x12000, scoped, tag = 'internal scratch']
  %s0 = inlined_call_operand.vmem [shape: bf16[2,8,32], index: 0, kind: input, shape index: {}]
  %s1 = inlined_call_operand.vmem [shape: bf16[2,8,32], index: 1, kind: input, shape index: {}]
  %s2 = inlined_call_operand.vmem [shape: bf16[2,8,32], index: 2, kind: input, shape index: {}]
  %s3 = inlined_call_operand.hbm [shape: f32[2,4,8,8], index: 3, kind: output, shape index: {0}]
  %s4 = inlined_call_operand.vmem [shape: bf16[2,8,32], index: 4, kind: output, shape index: {1}]
  %5 = xla_tuple %s3, %s4
  %s6 = sld [smem:[#allocation0]]
  $region53: #{mhca_forward.8} parent=0
    _
  %s8 = ssub.s32 1, %s6
  %s9 = scalar_select 0, %s8, %s6
  $region1: #{mhca_forward.8} parent=0
    #allocation2 [shape = 'u8[32768]{0}', space=vmem, size = 0x8000, scoped, tag = 'output window, operand 0']
    #allocation3 [shape = 's32[2]{0}', space=sflag, size = 0x8, scoped, tag = 'scoped memory for mhca_forward.8']
    %10 = vsyncpa [#allocation3], 0
    %s11 = scalar_lea.sflag [#allocation3], 1
    %12 = vsyncpa %s11, 0
    loop: start=0, step=1, limit=4
    $region2: #{mhca_forward.8} parent=1 // loop_pre_header
      _
    $region3: #{mhca_forward.8} parent=1 // loop_header
      %s14 = sphi 0, %s18
      %p15 = scmp.ge.s32.totalorder %s14, 4
      %s21 = sphi 0, %s33
      %s22 = sphi 0, %s29
      %s23 = sphi 0, %s21
      %s24 = sphi 0, %s22
      %s25 = sphi 0, %s23
      %s26 = sphi 0, %s24
      %s38 = sphi 0, %s40
      %s41 = sphi 0, %s38
      %s42 = sphi 0, %s41
      %s58 = sphi 0, %s42
      %s64 = sphi 0, %s66
      %s67 = sphi 0, %s64
      %s68 = sphi 0, %s67
      %s84 = sphi 0, %s68
      %s90 = sphi 0, %s92
      %s93 = sphi 0, %s90
      %s94 = sphi 0, %s93
      %s110 = sphi 0, %s94
      %s118 = sphi 0, %s120
      %s121 = sphi 0, %s118
      %s122 = sphi 0, %s121
      %s138 = sphi 0, %s122
      %s146 = sphi 0, %s148
      %s149 = sphi 0, %s146
      %s150 = sphi 0, %s149
      %s166 = sphi 0, %s150
    $region4: #{mhca_forward.8} parent=1 // loop_header_branch
      %17 = sbr.rel (%p15) target = $region8
    $region5: #{mhca_forward.8} parent=1 // loop_body
      %s19 = ssub.s32 %s14, 1
      %s20 = ssub.s32 %s14, 2
      %s27 = sadd.s32 1, %s22
      %p28 = scmp.ge.s32.totalorder %s27, 1
      %s29 = scalar_select %p28, 0, %s27
      %s30 = sadd.s32 1, %s21
      %s31 = scalar_select %p28, %s30, %s21
      %p32 = scmp.ge.s32.totalorder %s31, 2
      %s33 = scalar_select %p32, 0, %s31
      %s34 = ssub.s32 %s21, %s33
      %s35 = ssub.s32 %s22, %s29
      %s36 = sor.u32 %s34, %s35
      %p37 = scmp.eq.s32.totalorder %s36, 0
      %s39 = sadd.s32 %s38, 1
      %s40 = scalar_select %p37, %s38, %s39
      %p43 = pneg %p37
      %p44 = scmp.eq.s32.totalorder %s14, 1
      %p45 = por %p43, %p44
      %p46 = scmp.ne.s32.totalorder %s38, %s41
      %p47 = scmp.eq.s32.totalorder %s14, 0
      %p48 = por %p46, %p47
      %p49 = scmp.ne.s32.totalorder %s38, %s41
      %p50 = scmp.eq.s32.totalorder %s19, 1
      %p51 = por %p49, %p50
      %p52 = scmp.ne.s32.totalorder %s41, %s42
      %p53 = scmp.eq.s32.totalorder %s19, 0
      %p54 = por %p52, %p53
      %p55 = scmp.ne.s32.totalorder %s41, %s42
      %p56 = scmp.eq.s32.totalorder %s20, 1
      %p57 = por %p55, %p56
      %p59 = scmp.ne.s32.totalorder %s42, %s58
      %p60 = scmp.eq.s32.totalorder %s20, 0
      %p61 = por %p59, %p60
      %s62 = ssub.s32 %s21, %s33
      %p63 = scmp.eq.s32.totalorder %s62, 0
      %s65 = sadd.s32 %s64, 1
      %s66 = scalar_select %p63, %s64, %s65
      %p69 = pneg %p63
      %p70 = scmp.eq.s32.totalorder %s14, 1
      %p71 = por %p69, %p70
      %p72 = scmp.ne.s32.totalorder %s64, %s67
      %p73 = scmp.eq.s32.totalorder %s14, 0
      %p74 = por %p72, %p73
      %p75 = scmp.ne.s32.totalorder %s64, %s67
      %p76 = scmp.eq.s32.totalorder %s19, 1
      %p77 = por %p75, %p76
      %p78 = scmp.ne.s32.totalorder %s67, %s68
      %p79 = scmp.eq.s32.totalorder %s19, 0
      %p80 = por %p78, %p79
      %p81 = scmp.ne.s32.totalorder %s67, %s68
      %p82 = scmp.eq.s32.totalorder %s20, 1
      %p83 = por %p81, %p82
      %p85 = scmp.ne.s32.totalorder %s68, %s84
      %p86 = scmp.eq.s32.totalorder %s20, 0
      %p87 = por %p85, %p86
      %s88 = ssub.s32 %s21, %s33
      %p89 = scmp.eq.s32.totalorder %s88, 0
      %s91 = sadd.s32 %s90, 1
      %s92 = scalar_select %p89, %s90, %s91
      %p95 = pneg %p89
      %p96 = scmp.eq.s32.totalorder %s14, 1
      %p97 = por %p95, %p96
      %p98 = scmp.ne.s32.totalorder %s90, %s93
      %p99 = scmp.eq.s32.totalorder %s14, 0
      %p100 = por %p98, %p99
      %p101 = scmp.ne.s32.totalorder %s90, %s93
      %p102 = scmp.eq.s32.totalorder %s19, 1
      %p103 = por %p101, %p102
      %p104 = scmp.ne.s32.totalorder %s93, %s94
      %p105 = scmp.eq.s32.totalorder %s19, 0
      %p106 = por %p104, %p105
      %p107 = scmp.ne.s32.totalorder %s93, %s94
      %p108 = scmp.eq.s32.totalorder %s20, 1
      %p109 = por %p107, %p108
      %p111 = scmp.ne.s32.totalorder %s94, %s110
      %p112 = scmp.eq.s32.totalorder %s20, 0
      %p113 = por %p111, %p112
      %s114 = ssub.s32 %s21, %s33
      %s115 = ssub.s32 %s22, %s29
      %s116 = sor.u32 %s114, %s115
      %p117 = scmp.eq.s32.totalorder %s116, 0
      %s119 = sadd.s32 %s118, 1
      %s120 = scalar_select %p117, %s118, %s119
      %p123 = pneg %p117
      %p124 = scmp.eq.s32.totalorder %s14, 1
      %p125 = por %p123, %p124
      %p126 = scmp.ne.s32.totalorder %s118, %s121
      %p127 = scmp.eq.s32.totalorder %s14, 0
      %p128 = por %p126, %p127
      %p129 = scmp.ne.s32.totalorder %s118, %s121
      %p130 = scmp.eq.s32.totalorder %s19, 1
      %p131 = por %p129, %p130
      %p132 = scmp.ne.s32.totalorder %s121, %s122
      %p133 = scmp.eq.s32.totalorder %s19, 0
      %p134 = por %p132, %p133
      %p135 = scmp.ne.s32.totalorder %s121, %s122
      %p136 = scmp.eq.s32.totalorder %s20, 1
      %p137 = por %p135, %p136
      %p139 = scmp.ne.s32.totalorder %s122, %s138
      %p140 = scmp.eq.s32.totalorder %s20, 0
      %p141 = por %p139, %p140
      %s142 = ssub.s32 %s21, %s33
      %s143 = ssub.s32 %s22, %s29
      %s144 = sor.u32 %s142, %s143
      %p145 = scmp.eq.s32.totalorder %s144, 0
      %s147 = sadd.s32 %s146, 1
      %s148 = scalar_select %p145, %s146, %s147
      %p151 = pneg %p145
      %p152 = scmp.eq.s32.totalorder %s14, 1
      %p153 = por %p151, %p152
      %p154 = scmp.ne.s32.totalorder %s146, %s149
      %p155 = scmp.eq.s32.totalorder %s14, 0
      %p156 = por %p154, %p155
      %p157 = scmp.ne.s32.totalorder %s146, %s149
      %p158 = scmp.eq.s32.totalorder %s19, 1
      %p159 = por %p157, %p158
      %p160 = scmp.ne.s32.totalorder %s149, %s150
      %p161 = scmp.eq.s32.totalorder %s19, 0
      %p162 = por %p160, %p161
      %p163 = scmp.ne.s32.totalorder %s149, %s150
      %p164 = scmp.eq.s32.totalorder %s20, 1
      %p165 = por %p163, %p164
      %p167 = scmp.ne.s32.totalorder %s150, %s166
      %p168 = scmp.eq.s32.totalorder %s20, 0
      %p169 = por %p167, %p168
      %p170 = scmp.le.s32.totalorder 1, %s14
      %p171 = scmp.lt.s32.totalorder %s14, 3
      %p172 = pnand %p170, %p171
      %p173 = pneg %p172
      // Predicated region
      $region9: #{mhca_forward.8} parent=5 // pred_check
        _
      $region10: #{mhca_forward.8} parent=5 // pred_check_branch
        %175 = sbr.rel (%p172) target = $region12
      $region11: #{mhca_forward.8} parent=5 // pred_region
        %s176 = ssub.s32 %s14, 1
      $region12: #{mhca_forward.8} parent=5 // pred_fallthru
        _
      %p177 = scmp.lt.s32.totalorder %s14, 2
      // Predicated region
      $region13: #{mhca_forward.8} parent=5 // pred_check
        %p178 = pneg %p177
      $region14: #{mhca_forward.8} parent=5 // pred_check_branch
        %180 = sbr.rel (%p178) target = $region16
      $region15: #{mhca_forward.8} parent=5 // pred_region
        // Predicated region
        $region17: #{mhca_forward.8} parent=15 // pred_check
          %p181 = pneg %p48
        $region18: #{mhca_forward.8} parent=15 // pred_check_branch
          %183 = sbr.rel (%p181) target = $region20
        $region19: #{mhca_forward.8} parent=15 // pred_region
          %p184 = scmp.lt.s32.totalorder %s21, 1
          %s185 = scalar_select %p184, %s21, 1
          %p186 = scmp.lt.s32.totalorder %s22, 0
          %s187 = scalar_select %p186, %s22, 0
          %s188 = sadd.s32 %s187, %s185
          %s189 = smul.addr %s188, 4
          %s190 = scalar_lea.vmem %s0, %s189
        $region20: #{mhca_forward.8} parent=15 // pred_fallthru
          _
        // Predicated region
        $region21: #{mhca_forward.8} parent=15 // pred_check
          %p191 = pneg %p74
        $region22: #{mhca_forward.8} parent=15 // pred_check_branch
          %193 = sbr.rel (%p191) target = $region24
        $region23: #{mhca_forward.8} parent=15 // pred_region
          %p194 = scmp.lt.s32.totalorder %s21, 1
          %s195 = scalar_select %p194, %s21, 1
          %s196 = smul.addr %s195, 4
          %s197 = scalar_lea.vmem %s1, %s196
        $region24: #{mhca_forward.8} parent=15 // pred_fallthru
          _
        // Predicated region
        $region25: #{mhca_forward.8} parent=15 // pred_check
          %p198 = pneg %p100
        $region26: #{mhca_forward.8} parent=15 // pred_check_branch
          %200 = sbr.rel (%p198) target = $region28
        $region27: #{mhca_forward.8} parent=15 // pred_region
          %p201 = scmp.lt.s32.totalorder %s21, 1
          %s202 = scalar_select %p201, %s21, 1
          %s203 = smul.addr %s202, 4
          %s204 = scalar_lea.vmem %s2, %s203
        $region28: #{mhca_forward.8} parent=15 // pred_fallthru
          _
      $region16: #{mhca_forward.8} parent=5 // pred_fallthru
        _
      %p205 = scmp.le.s32.totalorder 1, %s14
      %p206 = scmp.lt.s32.totalorder %s14, 3
      %p207 = pnand %p205, %p206
      %p208 = pneg %p207
      // Predicated region
      $region29: #{mhca_forward.8} parent=5 // pred_check
        _
      $region30: #{mhca_forward.8} parent=5 // pred_check_branch
        %210 = sbr.rel (%p207) target = $region32
      $region31: #{mhca_forward.8} parent=5 // pred_region
        %s211 = ssub.s32 %s14, 1
        %p212 = scmp.lt.s32.totalorder %s23, 1
        %s213 = scalar_select %p212, %s23, 1
        %p214 = scmp.lt.s32.totalorder %s24, 0
        %s215 = scalar_select %p214, %s24, 0
        %s216 = sadd.s32 %s215, %s213
        %s217 = smul.addr %s216, 4
        %s218 = scalar_lea.vmem %s0, %s217
        %p219 = pneg %p54
        %p220 = pneg %p51
        %p221 = scmp.lt.s32.totalorder %s23, 1
        %s222 = scalar_select %p221, %s23, 1
        %s223 = smul.addr %s222, 4
        %s224 = scalar_lea.vmem %s1, %s223
        %p225 = pneg %p80
        %p226 = pneg %p77
        %p227 = scmp.lt.s32.totalorder %s23, 1
        %s228 = scalar_select %p227, %s23, 1
        %s229 = smul.addr %s228, 4
        %s230 = scalar_lea.vmem %s2, %s229
        %p231 = pneg %p106
        %p232 = pneg %p103
        %p233 = pneg %p134
        %p234 = pneg %p131
        %s235 = sand.u32 %s121, 1
        %s236 = scalar_lea.sflag [#allocation3], %s235
        %s237 = sand.u32 %s121, 1
        %s238 = smul.addr %s237, 32
        %s239 = scalar_lea.vmem [#allocation2], %s238
        %p240 = pneg %p162
        %p241 = pneg %p159
        %p242 = scmp.lt.s32.totalorder %s23, 1
        %s243 = scalar_select %p242, %s23, 1
        %p244 = scmp.lt.s32.totalorder %s24, 0
        %s245 = scalar_select %p244, %s24, 0
        %s246 = sadd.s32 %s245, %s243
        %s247 = smul.addr %s246, 4
        %s248 = scalar_lea.vmem %s4, %s247
        %p249 = scmp.lt.s32.totalorder %s23, 1
        %s250 = scalar_select %p249, %s23, 1
        %p251 = scmp.lt.s32.totalorder %s24, 0
        %s252 = scalar_select %p251, %s24, 0
        %s253 = sadd.s32 %s252, %s250
        %s254 = smul.addr %s253, 4
        %s255 = scalar_lea.vmem %s0, %s254
        %p256 = scmp.lt.s32.totalorder %s23, 1
        %s257 = scalar_select %p256, %s23, 1
        %s258 = smul.addr %s257, 4
        %s259 = scalar_lea.vmem %s1, %s258
        %p260 = scmp.lt.s32.totalorder %s23, 1
        %s261 = scalar_select %p260, %s23, 1
        %s262 = smul.addr %s261, 4
        %s263 = scalar_lea.vmem %s2, %s262
        %p264 = scmp.lt.s32.totalorder %s23, 1
        %s265 = scalar_select %p264, %s23, 1
        %p266 = scmp.lt.s32.totalorder %s24, 0
        %s267 = scalar_select %p266, %s24, 0
        %s268 = sadd.s32 %s267, %s265
        %s269 = smul.addr %s268, 4
        %s270 = scalar_lea.vmem %s4, %s269
        %v272 = vld [vmem:[%s255] sm:$0xf]
        %v273 = vld [vmem:[%s259] sm:$0xf]
        %v274 = vld [vmem:[%s263] sm:$0xf]
        %vm275 = vcmask 64512
        %v277 = vsel %vm275, %v272, 0
        %v280 = vsel %vm275, %v273, 0
        %282 = vmatprep.subr.bf16.mxu0 0
        %283 = vmatpush1.bf16.xpose.msra.mxu0 %v280
        %284 = vmatprep.subr.bf16.mxu0 0
        %285 = vmatpush1.bf16.xpose.msra.mxu0 0
        %286 = vmatprep.subr.bf16.mxu0 0
        %287 = vmatpush1.bf16.xpose.msra.mxu0 0
        %288 = vmatprep.subr.bf16.mxu0 0
        %289 = vmatpush1.bf16.xpose.msra.mxu0 0
        %290 = vmatprep.subr.bf16.mxu0 0
        %291 = vmatpush1.bf16.xpose.msra.mxu0 0
        %292 = vmatprep.subr.bf16.mxu0 0
        %293 = vmatpush1.bf16.xpose.msra.mxu0 0
        %294 = vmatprep.subr.bf16.mxu0 0
        %295 = vmatpush1.bf16.xpose.msra.mxu0 0
        %296 = vmatprep.subr.bf16.mxu0 0
        %297 = vmatpush1.bf16.xpose.msra.mxu0 0
        %298 = vmatprep.subr.bf16.mxu0 0
        %299 = vmatpush1.bf16.xpose.msra.mxu0 0
        %300 = vmatprep.subr.bf16.mxu0 0
        %301 = vmatpush1.bf16.xpose.msra.mxu0 0
        %302 = vmatprep.subr.bf16.mxu0 0
        %303 = vmatpush1.bf16.xpose.msra.mxu0 0
        %304 = vmatprep.subr.bf16.mxu0 0
        %305 = vmatpush1.bf16.xpose.msra.mxu0 0
        %306 = vmatprep.subr.bf16.mxu0 0
        %307 = vmatpush1.bf16.xpose.msra.mxu0 0
        %308 = vmatprep.subr.bf16.mxu0 0
        %309 = vmatpush1.bf16.xpose.msra.mxu0 0
        %310 = vmatprep.subr.bf16.mxu0 0
        %311 = vmatpush1.bf16.xpose.msra.mxu0 0
        %312 = vmatprep.subr.bf16.mxu0 0
        %313 = vmatpush1.bf16.xpose.msra.mxu0 0
        %314 = vmatprep.mubr.bf16.mxu0 0
        %315 = vmatmul.mubr.bf16.gmra.mrb[0].mxu0 %v277
        %v316 = vpop.f32.mrb[0].mxu0
        %v317 = vadd.f32 0.0, %v316
        %v318 = vpop.f32.mrb[0].mxu0
        %v319 = vpop.f32.mrb[0].mxu0
        %v320 = vpop.f32.mrb[0].mxu0
        %321 = vdwg.mxu0
        %v322 = vsel %vm275, %v317, -inf
        %323 = vmax.xlane.f32.xlu0 %v322
        %v324 = vpop.xlane.xlu0 %323
        %v325 = vsub.f32 %v317, %v324
        %v326 = vmul.f32 %v325, 1.442695
        %v327 = vpow.pop %v326
        %v328 = vsel %vm275, %v327, 0.0
        %329 = vadd.xlane.f32.xlu0 %v328
        %v330 = vpop.xlane.xlu0 %329
        %v331 = vrcp.pop %v330
        %v332 = vmul.f32 %v327, %v331
        %333 = vst.msk [vmem:[%s239] sm:$0xff] %vm275, %v332
        %v334 = vpack.c.bf16 %v332, %v332
        %v336 = vsel %vm275, %v334, 0
        %vm338 = vcmask 1043456
        %v340 = vsel %vm338, %v274, 0
        %342 = vmatprep.subr.bf16.mxu0 0
        %343 = vmatpush1.bf16.msra.mxu0 %v340
        %344 = vmatprep.subr.bf16.mxu0 0
        %345 = vmatpush1.bf16.msra.mxu0 0
        %346 = vmatprep.subr.bf16.mxu0 0
        %347 = vmatpush1.bf16.msra.mxu0 0
        %348 = vmatprep.subr.bf16.mxu0 0
        %349 = vmatpush1.bf16.msra.mxu0 0
        %350 = vmatprep.subr.bf16.mxu0 0
        %351 = vmatpush1.bf16.msra.mxu0 0
        %352 = vmatprep.subr.bf16.mxu0 0
        %353 = vmatpush1.bf16.msra.mxu0 0
        %354 = vmatprep.subr.bf16.mxu0 0
        %355 = vmatpush1.bf16.msra.mxu0 0
        %356 = vmatprep.subr.bf16.mxu0 0
        %357 = vmatpush1.bf16.msra.mxu0 0
        %358 = vmatprep.subr.bf16.mxu0 0
        %359 = vmatpush1.bf16.msra.mxu0 0
        %360 = vmatprep.subr.bf16.mxu0 0
        %361 = vmatpush1.bf16.msra.mxu0 0
        %362 = vmatprep.subr.bf16.mxu0 0
        %363 = vmatpush1.bf16.msra.mxu0 0
        %364 = vmatprep.subr.bf16.mxu0 0
        %365 = vmatpush1.bf16.msra.mxu0 0
        %366 = vmatprep.subr.bf16.mxu0 0
        %367 = vmatpush1.bf16.msra.mxu0 0
        %368 = vmatprep.subr.bf16.mxu0 0
        %369 = vmatpush1.bf16.msra.mxu0 0
        %370 = vmatprep.subr.bf16.mxu0 0
        %371 = vmatpush1.bf16.msra.mxu0 0
        %372 = vmatprep.subr.bf16.mxu0 0
        %373 = vmatpush1.bf16.msra.mxu0 0
        %374 = vmatprep.mubr.bf16.mxu0 0
        %375 = vmatmul.mubr.bf16.gmra.mrb[0].mxu0 %v336
        %v376 = vpop.f32.mrb[0].mxu0
        %v377 = vadd.f32 0.0, %v376
        %v378 = vpop.f32.mrb[0].mxu0
        %v379 = vpop.f32.mrb[0].mxu0
        %v380 = vpop.f32.mrb[0].mxu0
        %381 = vdwg.mxu0
        %v383 = vunpack.c.l.b16 %v272
        %v384 = vpack.c.b16 %v383, %v383
        %385 = vrot.lane.b32.xlu0 %v384, 120
        %v386 = vpop.permute.xlu0 %385
        %v388 = vunpack.c.l.b16 %v273
        %v389 = vpack.c.b16 %v388, %v388
        %390 = vrot.lane.b32.xlu0 %v389, 120
        %v391 = vpop.permute.xlu0 %390
        %v393 = vsel %vm275, %v386, 0
        %v396 = vsel %vm275, %v391, 0
        %398 = vmatprep.subr.bf16.mxu0 0
        %399 = vmatpush1.bf16.xpose.msra.mxu0 %v396
        %400 = vmatprep.subr.bf16.mxu0 0
        %401 = vmatpush1.bf16.xpose.msra.mxu0 0
        %402 = vmatprep.subr.bf16.mxu0 0
        %403 = vmatpush1.bf16.xpose.msra.mxu0 0
        %404 = vmatprep.subr.bf16.mxu0 0
        %405 = vmatpush1.bf16.xpose.msra.mxu0 0
        %406 = vmatprep.subr.bf16.mxu0 0
        %407 = vmatpush1.bf16.xpose.msra.mxu0 0
        %408 = vmatprep.subr.bf16.mxu0 0
        %409 = vmatpush1.bf16.xpose.msra.mxu0 0
        %410 = vmatprep.subr.bf16.mxu0 0
        %411 = vmatpush1.bf16.xpose.msra.mxu0 0
        %412 = vmatprep.subr.bf16.mxu0 0
        %413 = vmatpush1.bf16.xpose.msra.mxu0 0
        %414 = vmatprep.subr.bf16.mxu0 0
        %415 = vmatpush1.bf16.xpose.msra.mxu0 0
        %416 = vmatprep.subr.bf16.mxu0 0
        %417 = vmatpush1.bf16.xpose.msra.mxu0 0
        %418 = vmatprep.subr.bf16.mxu0 0
        %419 = vmatpush1.bf16.xpose.msra.mxu0 0
        %420 = vmatprep.subr.bf16.mxu0 0
        %421 = vmatpush1.bf16.xpose.msra.mxu0 0
        %422 = vmatprep.subr.bf16.mxu0 0
        %423 = vmatpush1.bf16.xpose.msra.mxu0 0
        %424 = vmatprep.subr.bf16.mxu0 0
        %425 = vmatpush1.bf16.xpose.msra.mxu0 0
        %426 = vmatprep.subr.bf16.mxu0 0
        %427 = vmatpush1.bf16.xpose.msra.mxu0 0
        %428 = vmatprep.subr.bf16.mxu0 0
        %429 = vmatpush1.bf16.xpose.msra.mxu0 0
        %430 = vmatprep.mubr.bf16.mxu0 0
        %431 = vmatmul.mubr.bf16.gmra.mrb[0].mxu0 %v393
        %v432 = vpop.f32.mrb[0].mxu0
        %v433 = vadd.f32 0.0, %v432
        %v434 = vpop.f32.mrb[0].mxu0
        %v435 = vpop.f32.mrb[0].mxu0
        %v436 = vpop.f32.mrb[0].mxu0
        %437 = vdwg.mxu0
        %v438 = vsel %vm275, %v433, -inf
        %439 = vmax.xlane.f32.xlu0 %v438
        %v440 = vpop.xlane.xlu0 %439
        %v441 = vsub.f32 %v433, %v440
        %v442 = vmul.f32 %v441, 1.442695
        %v443 = vpow.pop %v442
        %v444 = vsel %vm275, %v443, 0.0
        %445 = vadd.xlane.f32.xlu0 %v444
        %v446 = vpop.xlane.xlu0 %445
        %v447 = vrcp.pop %v446
        %v448 = vmul.f32 %v443, %v447
        %s449 = scalar_lea.vmem %s239, 8 [#allocation2]
        %450 = vst.msk [vmem:[%s449] sm:$0xff] %vm275, %v448
        %v451 = vpack.c.bf16 %v448, %v448
        %v453 = vunpack.c.l.b16 %v274
        %v454 = vpack.c.b16 %v453, %v453
        %455 = vrot.lane.b32.xlu0 %v454, 120
        %v456 = vpop.permute.xlu0 %455
        %v458 = vsel %vm275, %v451, 0
        %v461 = vsel %vm338, %v456, 0
        %463 = vmatprep.subr.bf16.mxu0 0
        %464 = vmatpush1.bf16.msra.mxu0 %v461
        %465 = vmatprep.subr.bf16.mxu0 0
        %466 = vmatpush1.bf16.msra.mxu0 0
        %467 = vmatprep.subr.bf16.mxu0 0
        %468 = vmatpush1.bf16.msra.mxu0 0
        %469 = vmatprep.subr.bf16.mxu0 0
        %470 = vmatpush1.bf16.msra.mxu0 0
        %471 = vmatprep.subr.bf16.mxu0 0
        %472 = vmatpush1.bf16.msra.mxu0 0
        %473 = vmatprep.subr.bf16.mxu0 0
        %474 = vmatpush1.bf16.msra.mxu0 0
        %475 = vmatprep.subr.bf16.mxu0 0
        %476 = vmatpush1.bf16.msra.mxu0 0
        %477 = vmatprep.subr.bf16.mxu0 0
        %478 = vmatpush1.bf16.msra.mxu0 0
        %479 = vmatprep.subr.bf16.mxu0 0
        %480 = vmatpush1.bf16.msra.mxu0 0
        %481 = vmatprep.subr.bf16.mxu0 0
        %482 = vmatpush1.bf16.msra.mxu0 0
        %483 = vmatprep.subr.bf16.mxu0 0
        %484 = vmatpush1.bf16.msra.mxu0 0
        %485 = vmatprep.subr.bf16.mxu0 0
        %486 = vmatpush1.bf16.msra.mxu0 0
        %487 = vmatprep.subr.bf16.mxu0 0
        %488 = vmatpush1.bf16.msra.mxu0 0
        %489 = vmatprep.subr.bf16.mxu0 0
        %490 = vmatpush1.bf16.msra.mxu0 0
        %491 = vmatprep.subr.bf16.mxu0 0
        %492 = vmatpush1.bf16.msra.mxu0 0
        %493 = vmatprep.subr.bf16.mxu0 0
        %494 = vmatpush1.bf16.msra.mxu0 0
        %495 = vmatprep.mubr.bf16.mxu0 0
        %496 = vmatmul.mubr.bf16.gmra.mrb[0].mxu0 %v458
        %v497 = vpop.f32.mrb[0].mxu0
        %v498 = vadd.f32 0.0, %v497
        %v499 = vpop.f32.mrb[0].mxu0
        %v500 = vpop.f32.mrb[0].mxu0
        %v501 = vpop.f32.mrb[0].mxu0
        %502 = vdwg.mxu0
        %503 = vrot.lane.b32.xlu0 %v384, 112
        %v504 = vpop.permute.xlu0 %503
        %505 = vrot.lane.b32.xlu0 %v389, 112
        %v506 = vpop.permute.xlu0 %505
        %v508 = vsel %vm275, %v504, 0
        %v511 = vsel %vm275, %v506, 0
        %513 = vmatprep.subr.bf16.mxu0 0
        %514 = vmatpush1.bf16.xpose.msra.mxu0 %v511
        %515 = vmatprep.subr.bf16.mxu0 0
        %516 = vmatpush1.bf16.xpose.msra.mxu0 0
        %517 = vmatprep.subr.bf16.mxu0 0
        %518 = vmatpush1.bf16.xpose.msra.mxu0 0
        %519 = vmatprep.subr.bf16.mxu0 0
        %520 = vmatpush1.bf16.xpose.msra.mxu0 0
        %521 = vmatprep.subr.bf16.mxu0 0
        %522 = vmatpush1.bf16.xpose.msra.mxu0 0
        %523 = vmatprep.subr.bf16.mxu0 0
        %524 = vmatpush1.bf16.xpose.msra.mxu0 0
        %525 = vmatprep.subr.bf16.mxu0 0
        %526 = vmatpush1.bf16.xpose.msra.mxu0 0
        %527 = vmatprep.subr.bf16.mxu0 0
        %528 = vmatpush1.bf16.xpose.msra.mxu0 0
        %529 = vmatprep.subr.bf16.mxu0 0
        %530 = vmatpush1.bf16.xpose.msra.mxu0 0
        %531 = vmatprep.subr.bf16.mxu0 0
        %532 = vmatpush1.bf16.xpose.msra.mxu0 0
        %533 = vmatprep.subr.bf16.mxu0 0
        %534 = vmatpush1.bf16.xpose.msra.mxu0 0
        %535 = vmatprep.subr.bf16.mxu0 0
        %536 = vmatpush1.bf16.xpose.msra.mxu0 0
        %537 = vmatprep.subr.bf16.mxu0 0
        %538 = vmatpush1.bf16.xpose.msra.mxu0 0
        %539 = vmatprep.subr.bf16.mxu0 0
        %540 = vmatpush1.bf16.xpose.msra.mxu0 0
        %541 = vmatprep.subr.bf16.mxu0 0
        %542 = vmatpush1.bf16.xpose.msra.mxu0 0
        %543 = vmatprep.subr.bf16.mxu0 0
        %544 = vmatpush1.bf16.xpose.msra.mxu0 0
        %545 = vmatprep.mubr.bf16.mxu0 0
        %546 = vmatmul.mubr.bf16.gmra.mrb[0].mxu0 %v508
        %v547 = vpop.f32.mrb[0].mxu0
        %v548 = vadd.f32 0.0, %v547
        %v549 = vpop.f32.mrb[0].mxu0
        %v550 = vpop.f32.mrb[0].mxu0
        %v551 = vpop.f32.mrb[0].mxu0
        %552 = vdwg.mxu0
        %v553 = vsel %vm275, %v548, -inf
        %554 = vmax.xlane.f32.xlu0 %v553
        %v555 = vpop.xlane.xlu0 %554
        %v556 = vsub.f32 %v548, %v555
        %v557 = vmul.f32 %v556, 1.442695
        %v558 = vpow.pop %v557
        %v559 = vsel %vm275, %v558, 0.0
        %560 = vadd.xlane.f32.xlu0 %v559
        %v561 = vpop.xlane.xlu0 %560
        %v562 = vrcp.pop %v561
        %v563 = vmul.f32 %v558, %v562
        %s564 = scalar_lea.vmem %s239, 16 [#allocation2]
        %565 = vst.msk [vmem:[%s564] sm:$0xff] %vm275, %v563
        %v566 = vpack.c.bf16 %v563, %v563
        %567 = vrot.lane.b32.xlu0 %v454, 112
        %v568 = vpop.permute.xlu0 %567
        %v570 = vsel %vm275, %v566, 0
        %v573 = vsel %vm338, %v568, 0
        %575 = vmatprep.subr.bf16.mxu0 0
        %576 = vmatpush1.bf16.msra.mxu0 %v573
        %577 = vmatprep.subr.bf16.mxu0 0
        %578 = vmatpush1.bf16.msra.mxu0 0
        %579 = vmatprep.subr.bf16.mxu0 0
        %580 = vmatpush1.bf16.msra.mxu0 0
        %581 = vmatprep.subr.bf16.mxu0 0
        %582 = vmatpush1.bf16.msra.mxu0 0
        %583 = vmatprep.subr.bf16.mxu0 0
        %584 = vmatpush1.bf16.msra.mxu0 0
        %585 = vmatprep.subr.bf16.mxu0 0
        %586 = vmatpush1.bf16.msra.mxu0 0
        %587 = vmatprep.subr.bf16.mxu0 0
        %588 = vmatpush1.bf16.msra.mxu0 0
        %589 = vmatprep.subr.bf16.mxu0 0
        %590 = vmatpush1.bf16.msra.mxu0 0
        %591 = vmatprep.subr.bf16.mxu0 0
        %592 = vmatpush1.bf16.msra.mxu0 0
        %593 = vmatprep.subr.bf16.mxu0 0
        %594 = vmatpush1.bf16.msra.mxu0 0
        %595 = vmatprep.subr.bf16.mxu0 0
        %596 = vmatpush1.bf16.msra.mxu0 0
        %597 = vmatprep.subr.bf16.mxu0 0
        %598 = vmatpush1.bf16.msra.mxu0 0
        %599 = vmatprep.subr.bf16.mxu0 0
        %600 = vmatpush1.bf16.msra.mxu0 0
        %601 = vmatprep.subr.bf16.mxu0 0
        %602 = vmatpush1.bf16.msra.mxu0 0
        %603 = vmatprep.subr.bf16.mxu0 0
        %604 = vmatpush1.bf16.msra.mxu0 0
        %605 = vmatprep.subr.bf16.mxu0 0
        %606 = vmatpush1.bf16.msra.mxu0 0
        %607 = vmatprep.mubr.bf16.mxu0 0
        %608 = vmatmul.mubr.bf16.gmra.mrb[0].mxu0 %v570
        %v609 = vpop.f32.mrb[0].mxu0
        %v610 = vadd.f32 0.0, %v609
        %v611 = vpop.f32.mrb[0].mxu0
        %v612 = vpop.f32.mrb[0].mxu0
        %v613 = vpop.f32.mrb[0].mxu0
        %614 = vdwg.mxu0
        %615 = vrot.lane.b32.xlu0 %v384, 104
        %v616 = vpop.permute.xlu0 %615
        %617 = vrot.lane.b32.xlu0 %v389, 104
        %v618 = vpop.permute.xlu0 %617
        %v620 = vsel %vm275, %v616, 0
        %v623 = vsel %vm275, %v618, 0
        %625 = vmatprep.subr.bf16.mxu0 0
        %626 = vmatpush1.bf16.xpose.msra.mxu0 %v623
        %627 = vmatprep.subr.bf16.mxu0 0
        %628 = vmatpush1.bf16.xpose.msra.mxu0 0
        %629 = vmatprep.subr.bf16.mxu0 0
        %630 = vmatpush1.bf16.xpose.msra.mxu0 0
        %631 = vmatprep.subr.bf16.mxu0 0
        %632 = vmatpush1.bf16.xpose.msra.mxu0 0
        %633 = vmatprep.subr.bf16.mxu0 0
        %634 = vmatpush1.bf16.xpose.msra.mxu0 0
        %635 = vmatprep.subr.bf16.mxu0 0
        %636 = vmatpush1.bf16.xpose.msra.mxu0 0
        %637 = vmatprep.subr.bf16.mxu0 0
        %638 = vmatpush1.bf16.xpose.msra.mxu0 0
        %639 = vmatprep.subr.bf16.mxu0 0
        %640 = vmatpush1.bf16.xpose.msra.mxu0 0
        %641 = vmatprep.subr.bf16.mxu0 0
        %642 = vmatpush1.bf16.xpose.msra.mxu0 0
        %643 = vmatprep.subr.bf16.mxu0 0
        %644 = vmatpush1.bf16.xpose.msra.mxu0 0
        %645 = vmatprep.subr.bf16.mxu0 0
        %646 = vmatpush1.bf16.xpose.msra.mxu0 0
        %647 = vmatprep.subr.bf16.mxu0 0
        %648 = vmatpush1.bf16.xpose.msra.mxu0 0
        %649 = vmatprep.subr.bf16.mxu0 0
        %650 = vmatpush1.bf16.xpose.msra.mxu0 0
        %651 = vmatprep.subr.bf16.mxu0 0
        %652 = vmatpush1.bf16.xpose.msra.mxu0 0
        %653 = vmatprep.subr.bf16.mxu0 0
        %654 = vmatpush1.bf16.xpose.msra.mxu0 0
        %655 = vmatprep.subr.bf16.mxu0 0
        %656 = vmatpush1.bf16.xpose.msra.mxu0 0
        %657 = vmatprep.mubr.bf16.mxu0 0
        %658 = vmatmul.mubr.bf16.gmra.mrb[0].mxu0 %v620
        %v659 = vpop.f32.mrb[0].mxu0
        %v660 = vadd.f32 0.0, %v659
        %v661 = vpop.f32.mrb[0].mxu0
        %v662 = vpop.f32.mrb[0].mxu0
        %v663 = vpop.f32.mrb[0].mxu0
        %664 = vdwg.mxu0
        %v665 = vsel %vm275, %v660, -inf
        %666 = vmax.xlane.f32.xlu0 %v665
        %v667 = vpop.xlane.xlu0 %666
        %v668 = vsub.f32 %v660, %v667
        %v669 = vmul.f32 %v668, 1.442695
        %v670 = vpow.pop %v669
        %v671 = vsel %vm275, %v670, 0.0
        %672 = vadd.xlane.f32.xlu0 %v671
        %v673 = vpop.xlane.xlu0 %672
        %v674 = vrcp.pop %v673
        %v675 = vmul.f32 %v670, %v674
        %s676 = scalar_lea.vmem %s239, 24 [#allocation2]
        %677 = vst.msk [vmem:[%s676] sm:$0xff] %vm275, %v675
        %v678 = vpack.c.bf16 %v675, %v675
        %679 = vrot.lane.b32.xlu0 %v454, 104
        %v680 = vpop.permute.xlu0 %679
        %v682 = vsel %vm275, %v678, 0
        %v685 = vsel %vm338, %v680, 0
        %687 = vmatprep.subr.bf16.mxu0 0
        %688 = vmatpush1.bf16.msra.mxu0 %v685
        %689 = vmatprep.subr.bf16.mxu0 0
        %690 = vmatpush1.bf16.msra.mxu0 0
        %691 = vmatprep.subr.bf16.mxu0 0
        %692 = vmatpush1.bf16.msra.mxu0 0
        %693 = vmatprep.subr.bf16.mxu0 0
        %694 = vmatpush1.bf16.msra.mxu0 0
        %695 = vmatprep.subr.bf16.mxu0 0
        %696 = vmatpush1.bf16.msra.mxu0 0
        %697 = vmatprep.subr.bf16.mxu0 0
        %698 = vmatpush1.bf16.msra.mxu0 0
        %699 = vmatprep.subr.bf16.mxu0 0
        %700 = vmatpush1.bf16.msra.mxu0 0
        %701 = vmatprep.subr.bf16.mxu0 0
        %702 = vmatpush1.bf16.msra.mxu0 0
        %703 = vmatprep.subr.bf16.mxu0 0
        %704 = vmatpush1.bf16.msra.mxu0 0
        %705 = vmatprep.subr.bf16.mxu0 0
        %706 = vmatpush1.bf16.msra.mxu0 0
        %707 = vmatprep.subr.bf16.mxu0 0
        %708 = vmatpush1.bf16.msra.mxu0 0
        %709 = vmatprep.subr.bf16.mxu0 0
        %710 = vmatpush1.bf16.msra.mxu0 0
        %711 = vmatprep.subr.bf16.mxu0 0
        %712 = vmatpush1.bf16.msra.mxu0 0
        %713 = vmatprep.subr.bf16.mxu0 0
        %714 = vmatpush1.bf16.msra.mxu0 0
        %715 = vmatprep.subr.bf16.mxu0 0
        %716 = vmatpush1.bf16.msra.mxu0 0
        %717 = vmatprep.subr.bf16.mxu0 0
        %718 = vmatpush1.bf16.msra.mxu0 0
        %719 = vmatprep.mubr.bf16.mxu0 0
        %720 = vmatmul.mubr.bf16.gmra.mrb[0].mxu0 %v682
        %v721 = vpop.f32.mrb[0].mxu0
        %v722 = vadd.f32 0.0, %v721
        %v723 = vpop.f32.mrb[0].mxu0
        %v724 = vpop.f32.mrb[0].mxu0
        %v725 = vpop.f32.mrb[0].mxu0
        %726 = vdwg.mxu0
        %728 = vrot.lane.b32.xlu0 %v498, 8
        %v729 = vpop.permute.xlu0 %728
        %732 = vrot.lane.b32.xlu0 %v610, 16
        %v733 = vpop.permute.xlu0 %732
        %736 = vrot.lane.b32.xlu0 %v722, 24
        %v737 = vpop.permute.xlu0 %736
        %v739 = vsel %vm275, %v377, %v729
        %vm740 = vcmask 130048
        %v741 = vsel %vm740, %v739, %v733
        %vm742 = vcmask 195584
        %v743 = vsel %vm742, %v741, %v737
        %v744 = vpack.c.bf16 %v743, %v743
        %vm745 = vcmask 257024
        %746 = vst.msk [vmem:[%s270] sm:$0xf] %vm745, %v744
        %s747 = sand.u32 %s121, 1
        %s748 = scalar_lea.sflag [#allocation3], %s747
        %s749 = sand.u32 %s121, 1
        %s750 = smul.addr %s749, 32
        %s751 = scalar_lea.vmem [#allocation2], %s750
        %p752 = scmp.lt.s32.totalorder %s23, 1
        %s753 = scalar_select %p752, %s23, 1
        %p754 = scmp.lt.s32.totalorder %s24, 0
        %s755 = scalar_select %p754, %s24, 0
        %s756 = sadd.s32 %s755, %s753
        %s757 = smul.addr %s756, 4
        %s758 = scalar_lea.vmem %s4, %s757
        // Predicated region
        $region33: #{mhca_forward.8} parent=31 // pred_check
          %p759 = pneg %p131
        $region34: #{mhca_forward.8} parent=31 // pred_check_branch
          %761 = sbr.rel (%p759) target = $region36
        $region35: #{mhca_forward.8} parent=31 // pred_region
          %s763 = ssub.s32 512, 512
          %764 = vsyncadd %s748, %s763
          %s765 = smul.addr %s23, 4
          %s766 = sadd.s32 %s24, %s765
          %s767 = smul.addr %s766, 128
          %s768 = scalar_lea.hbm %s3, %s767
          %s769 = sshll.u32 %s751, 4
          %s770 = int_to_ptr.vmem [resolvable:$true] %s769
          %775 = dma.vmem_to_hbm [thread:$0]  %s770, 512, %s768, %s748, 128, 128, 8
        $region36: #{mhca_forward.8} parent=31 // pred_fallthru
          _
        // Predicated region
        $region37: #{mhca_forward.8} parent=31 // pred_check
          %p776 = pneg %p159
        $region38: #{mhca_forward.8} parent=31 // pred_check_branch
          %778 = sbr.rel (%p776) target = $region40
        $region39: #{mhca_forward.8} parent=31 // pred_region
          _
        $region40: #{mhca_forward.8} parent=31 // pred_fallthru
          _
      $region32: #{mhca_forward.8} parent=5 // pred_fallthru
        _
      %p779 = scmp.le.s32.totalorder 2, %s14
      // Predicated region
      $region41: #{mhca_forward.8} parent=5 // pred_check
        %p780 = pneg %p779
      $region42: #{mhca_forward.8} parent=5 // pred_check_branch
        %782 = sbr.rel (%p780) target = $region44
      $region43: #{mhca_forward.8} parent=5 // pred_region
        %s783 = ssub.s32 %s14, 2
        // Predicated region
        $region45: #{mhca_forward.8} parent=43 // pred_check
          %p784 = pneg %p137
        $region46: #{mhca_forward.8} parent=43 // pred_check_branch
          %786 = sbr.rel (%p784) target = $region48
        $region47: #{mhca_forward.8} parent=43 // pred_region
          %s787 = sand.u32 %s122, 1
          %s788 = scalar_lea.sflag [#allocation3], %s787
          %s789 = sand.u32 %s122, 1
          %s790 = smul.addr %s789, 32
          %s791 = scalar_lea.vmem [#allocation2], %s790
          %792 = dma.done %s788, 512
        $region48: #{mhca_forward.8} parent=43 // pred_fallthru
          _
        // Predicated region
        $region49: #{mhca_forward.8} parent=43 // pred_check
          %p793 = pneg %p165
        $region50: #{mhca_forward.8} parent=43 // pred_check_branch
          %795 = sbr.rel (%p793) target = $region52
        $region51: #{mhca_forward.8} parent=43 // pred_region
          %p796 = scmp.lt.s32.totalorder %s25, 1
          %s797 = scalar_select %p796, %s25, 1
          %p798 = scmp.lt.s32.totalorder %s26, 0
          %s799 = scalar_select %p798, %s26, 0
          %s800 = sadd.s32 %s799, %s797
          %s801 = smul.addr %s800, 4
          %s802 = scalar_lea.vmem %s4, %s801
        $region52: #{mhca_forward.8} parent=43 // pred_fallthru
          _
      $region44: #{mhca_forward.8} parent=5 // pred_fallthru
        _
    $region6: #{mhca_forward.8} parent=1 // loop_footer
      %s18 = sadd.s32 1, %s14
    $region7: #{mhca_forward.8} parent=1 // loop_footer_branch
      %13 = sbr.rel target = $region3
    $region8: #{mhca_forward.8} parent=1 // loop_exit
      _
    %803 = vsyncpa [#allocation3], 1
    %s804 = scalar_lea.sflag [#allocation3], 1
    %805 = vsyncpa %s804, 1

</llo_original>
